<compile_context>
chip_gen: v6e
topology: v6e:2x2x1
jax: 0.10.0
libtpu: 0.0.40
codegen_flags: <defaults>
</compile_context>

<pallas_src>
import functools

import numpy as np
import jax
import jax.numpy as jnp
from jax import lax
from jax.experimental import pallas as pl
from jax.experimental.pallas import tpu as pltpu


_INV_SQRT2 = float(1.0 / np.sqrt(2.0))


# ----------------------------- kernel helpers -----------------------------

def _layer_norm(v, g, b, eps=1e-5):
    # PyTorch nn.LayerNorm: biased variance over last dim, eps inside sqrt.
    # g, b are already broadcast to v.shape (hoisted once in the kernel).
    mu = jnp.mean(v, axis=-1, keepdims=True)
    var = jnp.mean(jnp.square(v - mu), axis=-1, keepdims=True)
    return (v - mu) * lax.rsqrt(var + eps) * g + b


def _gelu_exact(x):
    # nn.GELU() default = exact erf formulation (kept for PyTorch parity).
    return 0.5 * x * (1.0 + lax.erf(x * _INV_SQRT2))


# ------------------------------- the kernel -------------------------------

def mixer_kernel(n_layers, nb, S, H, S4, H4,
                 x_ref,      # (nb, S, H)  activations for this grid step
                 cr_ref,     # (8, H4)     row consts: ln_g, ln_b, tn_g, tn_b,
                             #             cn_g, cn_b, cb2 (first H lanes), cb1
                 cc_ref,     # (S4+S, 1)   col consts: tb1 (rows 0:S4), tb2
                 tw1_ref,    # (S4, S)     token-mixer Conv1d(k=1) weight 1
                 tw2_ref,    # (S, S4)     token-mixer Conv1d(k=1) weight 2
                 cw1_ref,    # (H, H4)     channel-mixer Linear weight 1 (pre-T)
                 cw2_ref,    # (H4, H)     channel-mixer Linear weight 2 (pre-T)
                 o_ref):     # (nb, S, H)
    # ---- load every weight once; broadcast every gain/bias once (hoisted) ----
    ln_g = jnp.broadcast_to(cr_ref[0:1, 0:H], (S, H))
    ln_b = jnp.broadcast_to(cr_ref[1:2, 0:H], (S, H))
    tn_g = jnp.broadcast_to(cr_ref[2:3, 0:H], (S, H))
    tn_b = jnp.broadcast_to(cr_ref[3:4, 0:H], (S, H))
    cn_g = jnp.broadcast_to(cr_ref[4:5, 0:H], (S, H))
    cn_b = jnp.broadcast_to(cr_ref[5:6, 0:H], (S, H))
    cb2 = jnp.broadcast_to(cr_ref[6:7, 0:H], (S, H))
    cb1 = jnp.broadcast_to(cr_ref[7:8, :], (S, H4))
    tb1 = jnp.broadcast_to(cc_ref[0:S4, :], (S4, H))
    tb2 = jnp.broadcast_to(cc_ref[S4:S4 + S, :], (S, H))
    tw1 = tw1_ref[...]
    tw2 = tw2_ref[...]
    cw1 = cw1_ref[...]
    cw2 = cw2_ref[...]

    # Static batch loop + fully-unrolled layer loop (nb and n_layers are
    # Python ints); the LLO scheduler can interleave MXU push/pop with the
    # VPU LayerNorm / GELU work across iterations.
    for b in range(nb):
        # Shared entry LayerNorm.
        cur = _layer_norm(x_ref[b], ln_g, ln_b)
        for _ in range(n_layers):
            # ---- token mixer: PreNormResidual(FF over seq via Conv1d k=1) ----
            y = _layer_norm(cur, tn_g, tn_b)                                 # (S, H)
            h = jnp.dot(tw1, y, preferred_element_type=jnp.float32) + tb1   # (S4, H)
            h = _gelu_exact(h)
            cur = jnp.dot(tw2, h, preferred_element_type=jnp.float32) + tb2 + cur
            # ---- channel mixer: PreNormResidual(FF over hidden via Linear) ----
            y = _layer_norm(cur, cn_g, cn_b)                                 # (S, H)
            h = jnp.dot(y, cw1, preferred_element_type=jnp.float32) + cb1   # (S, H4)
            h = _gelu_exact(h)
            cur = jnp.dot(h, cw2, preferred_element_type=jnp.float32) + cb2 + cur
        # Shared exit LayerNorm.
        o_ref[b] = _layer_norm(cur, ln_g, ln_b)


# ------------------------------- wrapper -----------------------------------

def _num_tensorcores_per_chip():
    """Best-effort detection; only used to decide batch-grid parallelism."""
    try:
        d = jax.devices()[0]
        n = getattr(d, "num_cores", None)
        if isinstance(n, int) and n > 1:
            return n
        kind = str(getattr(d, "device_kind", "")).lower()
        if "7" in kind:           # v7x: 2 TensorCores per chip
            return 2
    except Exception:
        pass
    return 1


def mlp_mixer_forward(x, params, n_layers):
    """x: (B, S, H) float32.  params: 14 tensors in the module's layout."""
    (ln_g, ln_b, tn_g, tn_b, tw1, tb1, tw2, tb2,
     cn_g, cn_b, cw1, cb1, cw2, cb2) = params

    B, S, H = x.shape
    S4 = tw1.shape[0]            # expansion_factor * S
    H4 = cw1.shape[1]            # expansion_factor * H
    f32 = jnp.float32
    x = x.astype(f32)

    # Pack every per-feature gain/bias into two tiny operands (<1 KB total),
    # instead of pre-broadcasting full activation-shaped slabs in the wrapper.
    def _row(v):
        v = jnp.reshape(v.astype(f32), (1, -1))
        return jnp.pad(v, ((0, 0), (0, H4 - v.shape[1]))) if v.shape[1] < H4 else v

    consts_row = jnp.concatenate(
        [_row(ln_g), _row(ln_b), _row(tn_g), _row(tn_b),
         _row(cn_g), _row(cn_b), _row(cb2), _row(cb1)], axis=0)        # (8, H4)
    consts_col = jnp.concatenate(
        [jnp.reshape(tb1.astype(f32), (S4, 1)),
         jnp.reshape(tb2.astype(f32), (S, 1))], axis=0)                # (S4+S, 1)

    # v7x (2 TC/chip): one batch per "parallel" grid step (one per core).
    # v5e/v6e (1 TC): whole batch in one grid step (no extra per-step cost).
    if _num_tensorcores_per_chip() > 1 and B > 1:
        nb, grid, sem = 1, (B,), "parallel"
    else:
        nb, grid, sem = B, (1,), "arbitrary"

    def const_spec(a):
        nd = a.ndim
        return pl.BlockSpec(a.shape, lambda i, _nd=nd: (0,) * _nd)

    consts_and_weights = (consts_row, consts_col, tw1.astype(f32),
                          tw2.astype(f32), cw1.astype(f32), cw2.astype(f32))

    out = pl.pallas_call(
        functools.partial(mixer_kernel, n_layers, nb, S, H, S4, H4),
        out_shape=jax.ShapeDtypeStruct((B, S, H), f32),
        grid=grid,
        in_specs=[pl.BlockSpec((nb, S, H), lambda i: (i, 0, 0))]
                 + [const_spec(a) for a in consts_and_weights],
        out_specs=pl.BlockSpec((nb, S, H), lambda i: (i, 0, 0)),
        compiler_params=pltpu.CompilerParams(dimension_semantics=(sem,)),
    )(x, *consts_and_weights)

    return out


# ------------------------- pure-JAX reference -------------------------------

def mlp_mixer_reference(x, params, n_layers):
    (ln_g, ln_b, tn_g, tn_b, tw1, tb1, tw2, tb2,
     cn_g, cn_b, cw1, cb1, cw2, cb2) = params

    def ln(v, g, b):
        mu = jnp.mean(v, axis=-1, keepdims=True)
        var = jnp.mean(jnp.square(v - mu), axis=-1, keepdims=True)
        return (v - mu) / jnp.sqrt(var + 1e-5) * g + b

    def gelu(v):
        return 0.5 * v * (1.0 + jax.scipy.special.erf(v / np.sqrt(2.0)))

    cur = ln(x, ln_g, ln_b)
    for _ in range(n_layers):
        y = ln(cur, tn_g, tn_b)
        h = gelu(jnp.einsum("js,bsh->bjh", tw1, y) + tb1[None, :, None])
        cur = jnp.einsum("sj,bjh->bsh", tw2, h) + tb2[None, :, None] + cur
        y = ln(cur, cn_g, cn_b)
        h = gelu(y @ cw1 + cb1)
        cur = h @ cw2 + cb2 + cur
    return ln(cur, ln_g, ln_b)


# --------------------------------- main -------------------------------------

if __name__ == "__main__":
    # args: hidden_size=32, max_seq_length=8, num_hidden_layers=2,
    #       hidden_dropout_prob=0.0 (inference), expansion_factor=4
    B, S, H = 2, 8, 32
    EXP = 4
    N_LAYERS = 2

    key = jax.random.PRNGKey(0)
    ks = jax.random.split(key, 10)

    def init(k, shape, fan_in):
        bound = 1.0 / np.sqrt(fan_in)
        return jax.random.uniform(k, shape, jnp.float32, -bound, bound)

    # Outer (shared) LayerNorm
    ln_g = jnp.ones((H,), jnp.float32)
    ln_b = jnp.zeros((H,), jnp.float32)
    # Token mixer: PreNorm LayerNorm + Conv1d(S -> 4S, k=1) + Conv1d(4S -> S, k=1)
    tn_g = jnp.ones((H,), jnp.float32)
    tn_b = jnp.zeros((H,), jnp.float32)
    tw1 = init(ks[0], (EXP * S, S), S)          # Conv1d weight (out, in, 1) squeezed
    tb1 = init(ks[1], (EXP * S,), S)            # Conv1d bias (broadcasts over hidden)
    tw2 = init(ks[2], (S, EXP * S), EXP * S)
    tb2 = init(ks[3], (S,), EXP * S)
    # Channel mixer: PreNorm LayerNorm + Linear(H -> 4H) + Linear(4H -> H)
    cn_g = jnp.ones((H,), jnp.float32)
    cn_b = jnp.zeros((H,), jnp.float32)
    cw1 = init(ks[4], (H, EXP * H), H)          # stored pre-transposed: y @ cw1
    cb1 = init(ks[5], (EXP * H,), H)
    cw2 = init(ks[6], (EXP * H, H), EXP * H)
    cb2 = init(ks[7], (H,), EXP * H)

    params = [ln_g, ln_b, tn_g, tn_b, tw1, tb1, tw2, tb2,
              cn_g, cn_b, cw1, cb1, cw2, cb2]

    x = jax.random.normal(ks[8], (B, S, H), jnp.float32)

    out = mlp_mixer_forward(x, params, N_LAYERS)
    out = jax.block_until_ready(out)

    ref = mlp_mixer_reference(x, params, N_LAYERS)
    np.testing.assert_allclose(np.asarray(out), np.asarray(ref),
                               rtol=2e-5, atol=2e-5)

    print("KERNEL_OK")
</pallas_src>

<mosaic_0001>
module attributes {stable_mosaic.version = 11 : i64} {
  func.func @mixer_kernel(%arg0: i32, %arg1: memref<2x8x32xf32, #tpu.memory_space<vmem>>, %arg2: memref<8x128xf32, #tpu.memory_space<vmem>>, %arg3: memref<40x1xf32, #tpu.memory_space<vmem>>, %arg4: memref<32x8xf32, #tpu.memory_space<vmem>>, %arg5: memref<8x32xf32, #tpu.memory_space<vmem>>, %arg6: memref<32x128xf32, #tpu.memory_space<vmem>>, %arg7: memref<128x32xf32, #tpu.memory_space<vmem>>, %arg8: memref<2x8x32xf32, #tpu.memory_space<vmem>>) attributes {dimension_semantics = [#tpu.dimension_semantics<arbitrary>], iteration_bounds = array<i64: 1>, scalar_prefetch = 0 : i64, scratch_operands = 0 : i64, tpu.core_type = #tpu.core_type<tc>, window_params = [{transform_indices = @transform_0, window_bounds = array<i64: 2, 8, 32>}, {pipeline_mode = #tpu.pipeline_mode<synchronous>, transform_indices = @transform_1, window_bounds = array<i64: 8, 128>}, {pipeline_mode = #tpu.pipeline_mode<synchronous>, transform_indices = @transform_2, window_bounds = array<i64: 40, 1>}, {pipeline_mode = #tpu.pipeline_mode<synchronous>, transform_indices = @transform_3, window_bounds = array<i64: 32, 8>}, {pipeline_mode = #tpu.pipeline_mode<synchronous>, transform_indices = @transform_4, window_bounds = array<i64: 8, 32>}, {pipeline_mode = #tpu.pipeline_mode<synchronous>, transform_indices = @transform_5, window_bounds = array<i64: 32, 128>}, {pipeline_mode = #tpu.pipeline_mode<synchronous>, transform_indices = @transform_6, window_bounds = array<i64: 128, 32>}, {transform_indices = @transform_7, window_bounds = array<i64: 2, 8, 32>}]} {
    %c0 = arith.constant 0 : index
    %c0_0 = arith.constant 0 : index
    %0 = vector.load %arg2[%c0, %c0_0] : memref<8x128xf32, #tpu.memory_space<vmem>>, vector<1x32xf32>
    %1 = vector.shape_cast %0 : vector<1x32xf32> to vector<1x32xf32>
    %2 = vector.broadcast %1 : vector<1x32xf32> to vector<8x32xf32>
    %c1 = arith.constant 1 : index
    %c0_1 = arith.constant 0 : index
    %3 = vector.load %arg2[%c1, %c0_1] : memref<8x128xf32, #tpu.memory_space<vmem>>, vector<1x32xf32>
    %4 = vector.shape_cast %3 : vector<1x32xf32> to vector<1x32xf32>
    %5 = vector.broadcast %4 : vector<1x32xf32> to vector<8x32xf32>
    %c2 = arith.constant 2 : index
    %c0_2 = arith.constant 0 : index
    %6 = vector.load %arg2[%c2, %c0_2] : memref<8x128xf32, #tpu.memory_space<vmem>>, vector<1x32xf32>
    %7 = vector.shape_cast %6 : vector<1x32xf32> to vector<1x32xf32>
    %8 = vector.broadcast %7 : vector<1x32xf32> to vector<8x32xf32>
    %c3 = arith.constant 3 : index
    %c0_3 = arith.constant 0 : index
    %9 = vector.load %arg2[%c3, %c0_3] : memref<8x128xf32, #tpu.memory_space<vmem>>, vector<1x32xf32>
    %10 = vector.shape_cast %9 : vector<1x32xf32> to vector<1x32xf32>
    %11 = vector.broadcast %10 : vector<1x32xf32> to vector<8x32xf32>
    %c4 = arith.constant 4 : index
    %c0_4 = arith.constant 0 : index
    %12 = vector.load %arg2[%c4, %c0_4] : memref<8x128xf32, #tpu.memory_space<vmem>>, vector<1x32xf32>
    %13 = vector.shape_cast %12 : vector<1x32xf32> to vector<1x32xf32>
    %14 = vector.broadcast %13 : vector<1x32xf32> to vector<8x32xf32>
    %c5 = arith.constant 5 : index
    %c0_5 = arith.constant 0 : index
    %15 = vector.load %arg2[%c5, %c0_5] : memref<8x128xf32, #tpu.memory_space<vmem>>, vector<1x32xf32>
    %16 = vector.shape_cast %15 : vector<1x32xf32> to vector<1x32xf32>
    %17 = vector.broadcast %16 : vector<1x32xf32> to vector<8x32xf32>
    %c6 = arith.constant 6 : index
    %c0_6 = arith.constant 0 : index
    %18 = vector.load %arg2[%c6, %c0_6] : memref<8x128xf32, #tpu.memory_space<vmem>>, vector<1x32xf32>
    %19 = vector.shape_cast %18 : vector<1x32xf32> to vector<1x32xf32>
    %20 = vector.broadcast %19 : vector<1x32xf32> to vector<8x32xf32>
    %c7 = arith.constant 7 : index
    %c0_7 = arith.constant 0 : index
    %21 = vector.load %arg2[%c7, %c0_7] : memref<8x128xf32, #tpu.memory_space<vmem>>, vector<1x128xf32>
    %22 = vector.shape_cast %21 : vector<1x128xf32> to vector<1x128xf32>
    %23 = vector.broadcast %22 : vector<1x128xf32> to vector<8x128xf32>
    %c0_8 = arith.constant 0 : index
    %c0_9 = arith.constant 0 : index
    %24 = vector.load %arg3[%c0_8, %c0_9] : memref<40x1xf32, #tpu.memory_space<vmem>>, vector<32x1xf32>
    %25 = vector.shape_cast %24 : vector<32x1xf32> to vector<32x1xf32>
    %26 = vector.broadcast %25 : vector<32x1xf32> to vector<32x32xf32>
    %c32 = arith.constant 32 : index
    %c0_10 = arith.constant 0 : index
    %27 = vector.load %arg3[%c32, %c0_10] : memref<40x1xf32, #tpu.memory_space<vmem>>, vector<8x1xf32>
    %28 = vector.shape_cast %27 : vector<8x1xf32> to vector<8x1xf32>
    %29 = vector.broadcast %28 : vector<8x1xf32> to vector<8x32xf32>
    %c0_11 = arith.constant 0 : index
    %c0_12 = arith.constant 0 : index
    %30 = vector.load %arg4[%c0_11, %c0_12] : memref<32x8xf32, #tpu.memory_space<vmem>>, vector<32x8xf32>
    %c0_13 = arith.constant 0 : index
    %c0_14 = arith.constant 0 : index
    %31 = vector.load %arg5[%c0_13, %c0_14] : memref<8x32xf32, #tpu.memory_space<vmem>>, vector<8x32xf32>
    %c0_15 = arith.constant 0 : index
    %c0_16 = arith.constant 0 : index
    %32 = vector.load %arg6[%c0_15, %c0_16] : memref<32x128xf32, #tpu.memory_space<vmem>>, vector<32x128xf32>
    %c0_17 = arith.constant 0 : index
    %c0_18 = arith.constant 0 : index
    %33 = vector.load %arg7[%c0_17, %c0_18] : memref<128x32xf32, #tpu.memory_space<vmem>>, vector<128x32xf32>
    %c0_19 = arith.constant 0 : index
    %c0_20 = arith.constant 0 : index
    %c0_21 = arith.constant 0 : index
    %34 = vector.load %arg1[%c0_19, %c0_20, %c0_21] : memref<2x8x32xf32, #tpu.memory_space<vmem>>, vector<1x8x32xf32>
    %35 = vector.shape_cast %34 : vector<1x8x32xf32> to vector<8x32xf32>
    %cst = arith.constant dense<0.000000e+00> : vector<8xf32>
    %36 = vector.multi_reduction <add>, %35, %cst [1] : vector<8x32xf32> to vector<8xf32>
    %37 = vector.shape_cast %36 : vector<8xf32> to vector<8x1xf32>
    %cst_22 = arith.constant 3.200000e+01 : f32
    %38 = vector.broadcast %cst_22 : f32 to vector<8x1xf32>
    %39 = arith.divf %37, %38 : vector<8x1xf32>
    %40 = vector.broadcast %39 : vector<8x1xf32> to vector<8x32xf32>
    %41 = arith.subf %35, %40 : vector<8x32xf32>
    %42 = arith.mulf %41, %41 : vector<8x32xf32>
    %cst_23 = arith.constant dense<0.000000e+00> : vector<8xf32>
    %43 = vector.multi_reduction <add>, %42, %cst_23 [1] : vector<8x32xf32> to vector<8xf32>
    %44 = vector.shape_cast %43 : vector<8xf32> to vector<8x1xf32>
    %cst_24 = arith.constant 3.200000e+01 : f32
    %45 = vector.broadcast %cst_24 : f32 to vector<8x1xf32>
    %46 = arith.divf %44, %45 : vector<8x1xf32>
    %47 = vector.broadcast %39 : vector<8x1xf32> to vector<8x32xf32>
    %48 = arith.subf %35, %47 : vector<8x32xf32>
    %cst_25 = arith.constant 9.99999974E-6 : f32
    %49 = vector.broadcast %cst_25 : f32 to vector<8x1xf32>
    %50 = arith.addf %46, %49 : vector<8x1xf32>
    %51 = math.rsqrt %50 : vector<8x1xf32>
    %52 = vector.broadcast %51 : vector<8x1xf32> to vector<8x32xf32>
    %53 = arith.mulf %48, %52 : vector<8x32xf32>
    %54 = arith.mulf %53, %2 : vector<8x32xf32>
    %55 = arith.addf %54, %5 : vector<8x32xf32>
    %cst_26 = arith.constant dense<0.000000e+00> : vector<8xf32>
    %56 = vector.multi_reduction <add>, %55, %cst_26 [1] : vector<8x32xf32> to vector<8xf32>
    %57 = vector.shape_cast %56 : vector<8xf32> to vector<8x1xf32>
    %cst_27 = arith.constant 3.200000e+01 : f32
    %58 = vector.broadcast %cst_27 : f32 to vector<8x1xf32>
    %59 = arith.divf %57, %58 : vector<8x1xf32>
    %60 = vector.broadcast %59 : vector<8x1xf32> to vector<8x32xf32>
    %61 = arith.subf %55, %60 : vector<8x32xf32>
    %62 = arith.mulf %61, %61 : vector<8x32xf32>
    %cst_28 = arith.constant dense<0.000000e+00> : vector<8xf32>
    %63 = vector.multi_reduction <add>, %62, %cst_28 [1] : vector<8x32xf32> to vector<8xf32>
    %64 = vector.shape_cast %63 : vector<8xf32> to vector<8x1xf32>
    %cst_29 = arith.constant 3.200000e+01 : f32
    %65 = vector.broadcast %cst_29 : f32 to vector<8x1xf32>
    %66 = arith.divf %64, %65 : vector<8x1xf32>
    %67 = vector.broadcast %59 : vector<8x1xf32> to vector<8x32xf32>
    %68 = arith.subf %55, %67 : vector<8x32xf32>
    %cst_30 = arith.constant 9.99999974E-6 : f32
    %69 = vector.broadcast %cst_30 : f32 to vector<8x1xf32>
    %70 = arith.addf %66, %69 : vector<8x1xf32>
    %71 = math.rsqrt %70 : vector<8x1xf32>
    %72 = vector.broadcast %71 : vector<8x1xf32> to vector<8x32xf32>
    %73 = arith.mulf %68, %72 : vector<8x32xf32>
    %74 = arith.mulf %73, %8 : vector<8x32xf32>
    %75 = arith.addf %74, %11 : vector<8x32xf32>
    %cst_31 = arith.constant dense<0.000000e+00> : vector<32x32xf32>
    %76 = tpu.matmul %30, %75, %cst_31 {dimension_numbers = #tpu.dot_dimension_numbers<[1], [0], [0], [1], [0, 0, 1, 1], [], []>} : vector<32x8xf32>, vector<8x32xf32>, vector<32x32xf32> -> vector<32x32xf32>
    %77 = arith.addf %76, %26 : vector<32x32xf32>
    %cst_32 = arith.constant 5.000000e-01 : f32
    %78 = vector.broadcast %cst_32 : f32 to vector<32x32xf32>
    %79 = arith.mulf %78, %77 : vector<32x32xf32>
    %cst_33 = arith.constant 0.707106769 : f32
    %80 = vector.broadcast %cst_33 : f32 to vector<32x32xf32>
    %81 = arith.mulf %77, %80 : vector<32x32xf32>
    %82 = math.erf %81 : vector<32x32xf32>
    %cst_34 = arith.constant 1.000000e+00 : f32
    %83 = vector.broadcast %cst_34 : f32 to vector<32x32xf32>
    %84 = arith.addf %83, %82 : vector<32x32xf32>
    %85 = arith.mulf %79, %84 : vector<32x32xf32>
    %cst_35 = arith.constant dense<0.000000e+00> : vector<8x32xf32>
    %86 = tpu.matmul %31, %85, %cst_35 {dimension_numbers = #tpu.dot_dimension_numbers<[1], [0], [0], [1], [0, 0, 1, 1], [], []>} : vector<8x32xf32>, vector<32x32xf32>, vector<8x32xf32> -> vector<8x32xf32>
    %87 = arith.addf %86, %29 : vector<8x32xf32>
    %88 = arith.addf %87, %55 : vector<8x32xf32>
    %cst_36 = arith.constant dense<0.000000e+00> : vector<8xf32>
    %89 = vector.multi_reduction <add>, %88, %cst_36 [1] : vector<8x32xf32> to vector<8xf32>
    %90 = vector.shape_cast %89 : vector<8xf32> to vector<8x1xf32>
    %cst_37 = arith.constant 3.200000e+01 : f32
    %91 = vector.broadcast %cst_37 : f32 to vector<8x1xf32>
    %92 = arith.divf %90, %91 : vector<8x1xf32>
    %93 = vector.broadcast %92 : vector<8x1xf32> to vector<8x32xf32>
    %94 = arith.subf %88, %93 : vector<8x32xf32>
    %95 = arith.mulf %94, %94 : vector<8x32xf32>
    %cst_38 = arith.constant dense<0.000000e+00> : vector<8xf32>
    %96 = vector.multi_reduction <add>, %95, %cst_38 [1] : vector<8x32xf32> to vector<8xf32>
    %97 = vector.shape_cast %96 : vector<8xf32> to vector<8x1xf32>
    %cst_39 = arith.constant 3.200000e+01 : f32
    %98 = vector.broadcast %cst_39 : f32 to vector<8x1xf32>
    %99 = arith.divf %97, %98 : vector<8x1xf32>
    %100 = vector.broadcast %92 : vector<8x1xf32> to vector<8x32xf32>
    %101 = arith.subf %88, %100 : vector<8x32xf32>
    %cst_40 = arith.constant 9.99999974E-6 : f32
    %102 = vector.broadcast %cst_40 : f32 to vector<8x1xf32>
    %103 = arith.addf %99, %102 : vector<8x1xf32>
    %104 = math.rsqrt %103 : vector<8x1xf32>
    %105 = vector.broadcast %104 : vector<8x1xf32> to vector<8x32xf32>
    %106 = arith.mulf %101, %105 : vector<8x32xf32>
    %107 = arith.mulf %106, %14 : vector<8x32xf32>
    %108 = arith.addf %107, %17 : vector<8x32xf32>
    %cst_41 = arith.constant dense<0.000000e+00> : vector<8x128xf32>
    %109 = tpu.matmul %108, %32, %cst_41 {dimension_numbers = #tpu.dot_dimension_numbers<[1], [0], [0], [1], [0, 0, 1, 1], [], []>} : vector<8x32xf32>, vector<32x128xf32>, vector<8x128xf32> -> vector<8x128xf32>
    %110 = arith.addf %109, %23 : vector<8x128xf32>
    %cst_42 = arith.constant 5.000000e-01 : f32
    %111 = vector.broadcast %cst_42 : f32 to vector<8x128xf32>
    %112 = arith.mulf %111, %110 : vector<8x128xf32>
    %cst_43 = arith.constant 0.707106769 : f32
    %113 = vector.broadcast %cst_43 : f32 to vector<8x128xf32>
    %114 = arith.mulf %110, %113 : vector<8x128xf32>
    %115 = math.erf %114 : vector<8x128xf32>
    %cst_44 = arith.constant 1.000000e+00 : f32
    %116 = vector.broadcast %cst_44 : f32 to vector<8x128xf32>
    %117 = arith.addf %116, %115 : vector<8x128xf32>
    %118 = arith.mulf %112, %117 : vector<8x128xf32>
    %cst_45 = arith.constant dense<0.000000e+00> : vector<8x32xf32>
    %119 = tpu.matmul %118, %33, %cst_45 {dimension_numbers = #tpu.dot_dimension_numbers<[1], [0], [0], [1], [0, 0, 1, 1], [], []>} : vector<8x128xf32>, vector<128x32xf32>, vector<8x32xf32> -> vector<8x32xf32>
    %120 = arith.addf %119, %20 : vector<8x32xf32>
    %121 = arith.addf %120, %88 : vector<8x32xf32>
    %cst_46 = arith.constant dense<0.000000e+00> : vector<8xf32>
    %122 = vector.multi_reduction <add>, %121, %cst_46 [1] : vector<8x32xf32> to vector<8xf32>
    %123 = vector.shape_cast %122 : vector<8xf32> to vector<8x1xf32>
    %cst_47 = arith.constant 3.200000e+01 : f32
    %124 = vector.broadcast %cst_47 : f32 to vector<8x1xf32>
    %125 = arith.divf %123, %124 : vector<8x1xf32>
    %126 = vector.broadcast %125 : vector<8x1xf32> to vector<8x32xf32>
    %127 = arith.subf %121, %126 : vector<8x32xf32>
    %128 = arith.mulf %127, %127 : vector<8x32xf32>
    %cst_48 = arith.constant dense<0.000000e+00> : vector<8xf32>
    %129 = vector.multi_reduction <add>, %128, %cst_48 [1] : vector<8x32xf32> to vector<8xf32>
    %130 = vector.shape_cast %129 : vector<8xf32> to vector<8x1xf32>
    %cst_49 = arith.constant 3.200000e+01 : f32
    %131 = vector.broadcast %cst_49 : f32 to vector<8x1xf32>
    %132 = arith.divf %130, %131 : vector<8x1xf32>
    %133 = vector.broadcast %125 : vector<8x1xf32> to vector<8x32xf32>
    %134 = arith.subf %121, %133 : vector<8x32xf32>
    %cst_50 = arith.constant 9.99999974E-6 : f32
    %135 = vector.broadcast %cst_50 : f32 to vector<8x1xf32>
    %136 = arith.addf %132, %135 : vector<8x1xf32>
    %137 = math.rsqrt %136 : vector<8x1xf32>
    %138 = vector.broadcast %137 : vector<8x1xf32> to vector<8x32xf32>
    %139 = arith.mulf %134, %138 : vector<8x32xf32>
    %140 = arith.mulf %139, %8 : vector<8x32xf32>
    %141 = arith.addf %140, %11 : vector<8x32xf32>
    %cst_51 = arith.constant dense<0.000000e+00> : vector<32x32xf32>
    %142 = tpu.matmul %30, %141, %cst_51 {dimension_numbers = #tpu.dot_dimension_numbers<[1], [0], [0], [1], [0, 0, 1, 1], [], []>} : vector<32x8xf32>, vector<8x32xf32>, vector<32x32xf32> -> vector<32x32xf32>
    %143 = arith.addf %142, %26 : vector<32x32xf32>
    %cst_52 = arith.constant 5.000000e-01 : f32
    %144 = vector.broadcast %cst_52 : f32 to vector<32x32xf32>
    %145 = arith.mulf %144, %143 : vector<32x32xf32>
    %cst_53 = arith.constant 0.707106769 : f32
    %146 = vector.broadcast %cst_53 : f32 to vector<32x32xf32>
    %147 = arith.mulf %143, %146 : vector<32x32xf32>
    %148 = math.erf %147 : vector<32x32xf32>
    %cst_54 = arith.constant 1.000000e+00 : f32
    %149 = vector.broadcast %cst_54 : f32 to vector<32x32xf32>
    %150 = arith.addf %149, %148 : vector<32x32xf32>
    %151 = arith.mulf %145, %150 : vector<32x32xf32>
    %cst_55 = arith.constant dense<0.000000e+00> : vector<8x32xf32>
    %152 = tpu.matmul %31, %151, %cst_55 {dimension_numbers = #tpu.dot_dimension_numbers<[1], [0], [0], [1], [0, 0, 1, 1], [], []>} : vector<8x32xf32>, vector<32x32xf32>, vector<8x32xf32> -> vector<8x32xf32>
    %153 = arith.addf %152, %29 : vector<8x32xf32>
    %154 = arith.addf %153, %121 : vector<8x32xf32>
    %cst_56 = arith.constant dense<0.000000e+00> : vector<8xf32>
    %155 = vector.multi_reduction <add>, %154, %cst_56 [1] : vector<8x32xf32> to vector<8xf32>
    %156 = vector.shape_cast %155 : vector<8xf32> to vector<8x1xf32>
    %cst_57 = arith.constant 3.200000e+01 : f32
    %157 = vector.broadcast %cst_57 : f32 to vector<8x1xf32>
    %158 = arith.divf %156, %157 : vector<8x1xf32>
    %159 = vector.broadcast %158 : vector<8x1xf32> to vector<8x32xf32>
    %160 = arith.subf %154, %159 : vector<8x32xf32>
    %161 = arith.mulf %160, %160 : vector<8x32xf32>
    %cst_58 = arith.constant dense<0.000000e+00> : vector<8xf32>
    %162 = vector.multi_reduction <add>, %161, %cst_58 [1] : vector<8x32xf32> to vector<8xf32>
    %163 = vector.shape_cast %162 : vector<8xf32> to vector<8x1xf32>
    %cst_59 = arith.constant 3.200000e+01 : f32
    %164 = vector.broadcast %cst_59 : f32 to vector<8x1xf32>
    %165 = arith.divf %163, %164 : vector<8x1xf32>
    %166 = vector.broadcast %158 : vector<8x1xf32> to vector<8x32xf32>
    %167 = arith.subf %154, %166 : vector<8x32xf32>
    %cst_60 = arith.constant 9.99999974E-6 : f32
    %168 = vector.broadcast %cst_60 : f32 to vector<8x1xf32>
    %169 = arith.addf %165, %168 : vector<8x1xf32>
    %170 = math.rsqrt %169 : vector<8x1xf32>
    %171 = vector.broadcast %170 : vector<8x1xf32> to vector<8x32xf32>
    %172 = arith.mulf %167, %171 : vector<8x32xf32>
    %173 = arith.mulf %172, %14 : vector<8x32xf32>
    %174 = arith.addf %173, %17 : vector<8x32xf32>
    %cst_61 = arith.constant dense<0.000000e+00> : vector<8x128xf32>
    %175 = tpu.matmul %174, %32, %cst_61 {dimension_numbers = #tpu.dot_dimension_numbers<[1], [0], [0], [1], [0, 0, 1, 1], [], []>} : vector<8x32xf32>, vector<32x128xf32>, vector<8x128xf32> -> vector<8x128xf32>
    %176 = arith.addf %175, %23 : vector<8x128xf32>
    %cst_62 = arith.constant 5.000000e-01 : f32
    %177 = vector.broadcast %cst_62 : f32 to vector<8x128xf32>
    %178 = arith.mulf %177, %176 : vector<8x128xf32>
    %cst_63 = arith.constant 0.707106769 : f32
    %179 = vector.broadcast %cst_63 : f32 to vector<8x128xf32>
    %180 = arith.mulf %176, %179 : vector<8x128xf32>
    %181 = math.erf %180 : vector<8x128xf32>
    %cst_64 = arith.constant 1.000000e+00 : f32
    %182 = vector.broadcast %cst_64 : f32 to vector<8x128xf32>
    %183 = arith.addf %182, %181 : vector<8x128xf32>
    %184 = arith.mulf %178, %183 : vector<8x128xf32>
    %cst_65 = arith.constant dense<0.000000e+00> : vector<8x32xf32>
    %185 = tpu.matmul %184, %33, %cst_65 {dimension_numbers = #tpu.dot_dimension_numbers<[1], [0], [0], [1], [0, 0, 1, 1], [], []>} : vector<8x128xf32>, vector<128x32xf32>, vector<8x32xf32> -> vector<8x32xf32>
    %186 = arith.addf %185, %20 : vector<8x32xf32>
    %187 = arith.addf %186, %154 : vector<8x32xf32>
    %cst_66 = arith.constant dense<0.000000e+00> : vector<8xf32>
    %188 = vector.multi_reduction <add>, %187, %cst_66 [1] : vector<8x32xf32> to vector<8xf32>
    %189 = vector.shape_cast %188 : vector<8xf32> to vector<8x1xf32>
    %cst_67 = arith.constant 3.200000e+01 : f32
    %190 = vector.broadcast %cst_67 : f32 to vector<8x1xf32>
    %191 = arith.divf %189, %190 : vector<8x1xf32>
    %192 = vector.broadcast %191 : vector<8x1xf32> to vector<8x32xf32>
    %193 = arith.subf %187, %192 : vector<8x32xf32>
    %194 = arith.mulf %193, %193 : vector<8x32xf32>
    %cst_68 = arith.constant dense<0.000000e+00> : vector<8xf32>
    %195 = vector.multi_reduction <add>, %194, %cst_68 [1] : vector<8x32xf32> to vector<8xf32>
    %196 = vector.shape_cast %195 : vector<8xf32> to vector<8x1xf32>
    %cst_69 = arith.constant 3.200000e+01 : f32
    %197 = vector.broadcast %cst_69 : f32 to vector<8x1xf32>
    %198 = arith.divf %196, %197 : vector<8x1xf32>
    %199 = vector.broadcast %191 : vector<8x1xf32> to vector<8x32xf32>
    %200 = arith.subf %187, %199 : vector<8x32xf32>
    %cst_70 = arith.constant 9.99999974E-6 : f32
    %201 = vector.broadcast %cst_70 : f32 to vector<8x1xf32>
    %202 = arith.addf %198, %201 : vector<8x1xf32>
    %203 = math.rsqrt %202 : vector<8x1xf32>
    %204 = vector.broadcast %203 : vector<8x1xf32> to vector<8x32xf32>
    %205 = arith.mulf %200, %204 : vector<8x32xf32>
    %206 = arith.mulf %205, %2 : vector<8x32xf32>
    %207 = arith.addf %206, %5 : vector<8x32xf32>
    %c0_71 = arith.constant 0 : index
    %c0_72 = arith.constant 0 : index
    %c0_73 = arith.constant 0 : index
    %208 = vector.load %arg8[%c0_71, %c0_72, %c0_73] : memref<2x8x32xf32, #tpu.memory_space<vmem>>, vector<1x8x32xf32>
    %209 = vector.shape_cast %208 : vector<1x8x32xf32> to vector<8x32xf32>
    %210 = vector.shape_cast %207 : vector<8x32xf32> to vector<1x8x32xf32>
    tpu.vector_store %arg8[%c0_71, %c0_72, %c0_73], %210 {strides = array<i32>} : memref<2x8x32xf32, #tpu.memory_space<vmem>>, vector<1x8x32xf32>,
    %c1_74 = arith.constant 1 : index
    %c0_75 = arith.constant 0 : index
    %c0_76 = arith.constant 0 : index
    %211 = vector.load %arg1[%c1_74, %c0_75, %c0_76] : memref<2x8x32xf32, #tpu.memory_space<vmem>>, vector<1x8x32xf32>
    %212 = vector.shape_cast %211 : vector<1x8x32xf32> to vector<8x32xf32>
    %cst_77 = arith.constant dense<0.000000e+00> : vector<8xf32>
    %213 = vector.multi_reduction <add>, %212, %cst_77 [1] : vector<8x32xf32> to vector<8xf32>
    %214 = vector.shape_cast %213 : vector<8xf32> to vector<8x1xf32>
    %cst_78 = arith.constant 3.200000e+01 : f32
    %215 = vector.broadcast %cst_78 : f32 to vector<8x1xf32>
    %216 = arith.divf %214, %215 : vector<8x1xf32>
    %217 = vector.broadcast %216 : vector<8x1xf32> to vector<8x32xf32>
    %218 = arith.subf %212, %217 : vector<8x32xf32>
    %219 = arith.mulf %218, %218 : vector<8x32xf32>
    %cst_79 = arith.constant dense<0.000000e+00> : vector<8xf32>
    %220 = vector.multi_reduction <add>, %219, %cst_79 [1] : vector<8x32xf32> to vector<8xf32>
    %221 = vector.shape_cast %220 : vector<8xf32> to vector<8x1xf32>
    %cst_80 = arith.constant 3.200000e+01 : f32
    %222 = vector.broadcast %cst_80 : f32 to vector<8x1xf32>
    %223 = arith.divf %221, %222 : vector<8x1xf32>
    %224 = vector.broadcast %216 : vector<8x1xf32> to vector<8x32xf32>
    %225 = arith.subf %212, %224 : vector<8x32xf32>
    %cst_81 = arith.constant 9.99999974E-6 : f32
    %226 = vector.broadcast %cst_81 : f32 to vector<8x1xf32>
    %227 = arith.addf %223, %226 : vector<8x1xf32>
    %228 = math.rsqrt %227 : vector<8x1xf32>
    %229 = vector.broadcast %228 : vector<8x1xf32> to vector<8x32xf32>
    %230 = arith.mulf %225, %229 : vector<8x32xf32>
    %231 = arith.mulf %230, %2 : vector<8x32xf32>
    %232 = arith.addf %231, %5 : vector<8x32xf32>
    %cst_82 = arith.constant dense<0.000000e+00> : vector<8xf32>
    %233 = vector.multi_reduction <add>, %232, %cst_82 [1] : vector<8x32xf32> to vector<8xf32>
    %234 = vector.shape_cast %233 : vector<8xf32> to vector<8x1xf32>
    %cst_83 = arith.constant 3.200000e+01 : f32
    %235 = vector.broadcast %cst_83 : f32 to vector<8x1xf32>
    %236 = arith.divf %234, %235 : vector<8x1xf32>
    %237 = vector.broadcast %236 : vector<8x1xf32> to vector<8x32xf32>
    %238 = arith.subf %232, %237 : vector<8x32xf32>
    %239 = arith.mulf %238, %238 : vector<8x32xf32>
    %cst_84 = arith.constant dense<0.000000e+00> : vector<8xf32>
    %240 = vector.multi_reduction <add>, %239, %cst_84 [1] : vector<8x32xf32> to vector<8xf32>
    %241 = vector.shape_cast %240 : vector<8xf32> to vector<8x1xf32>
    %cst_85 = arith.constant 3.200000e+01 : f32
    %242 = vector.broadcast %cst_85 : f32 to vector<8x1xf32>
    %243 = arith.divf %241, %242 : vector<8x1xf32>
    %244 = vector.broadcast %236 : vector<8x1xf32> to vector<8x32xf32>
    %245 = arith.subf %232, %244 : vector<8x32xf32>
    %cst_86 = arith.constant 9.99999974E-6 : f32
    %246 = vector.broadcast %cst_86 : f32 to vector<8x1xf32>
    %247 = arith.addf %243, %246 : vector<8x1xf32>
    %248 = math.rsqrt %247 : vector<8x1xf32>
    %249 = vector.broadcast %248 : vector<8x1xf32> to vector<8x32xf32>
    %250 = arith.mulf %245, %249 : vector<8x32xf32>
    %251 = arith.mulf %250, %8 : vector<8x32xf32>
    %252 = arith.addf %251, %11 : vector<8x32xf32>
    %cst_87 = arith.constant dense<0.000000e+00> : vector<32x32xf32>
    %253 = tpu.matmul %30, %252, %cst_87 {dimension_numbers = #tpu.dot_dimension_numbers<[1], [0], [0], [1], [0, 0, 1, 1], [], []>} : vector<32x8xf32>, vector<8x32xf32>, vector<32x32xf32> -> vector<32x32xf32>
    %254 = arith.addf %253, %26 : vector<32x32xf32>
    %cst_88 = arith.constant 5.000000e-01 : f32
    %255 = vector.broadcast %cst_88 : f32 to vector<32x32xf32>
    %256 = arith.mulf %255, %254 : vector<32x32xf32>
    %cst_89 = arith.constant 0.707106769 : f32
    %257 = vector.broadcast %cst_89 : f32 to vector<32x32xf32>
    %258 = arith.mulf %254, %257 : vector<32x32xf32>
    %259 = math.erf %258 : vector<32x32xf32>
    %cst_90 = arith.constant 1.000000e+00 : f32
    %260 = vector.broadcast %cst_90 : f32 to vector<32x32xf32>
    %261 = arith.addf %260, %259 : vector<32x32xf32>
    %262 = arith.mulf %256, %261 : vector<32x32xf32>
    %cst_91 = arith.constant dense<0.000000e+00> : vector<8x32xf32>
    %263 = tpu.matmul %31, %262, %cst_91 {dimension_numbers = #tpu.dot_dimension_numbers<[1], [0], [0], [1], [0, 0, 1, 1], [], []>} : vector<8x32xf32>, vector<32x32xf32>, vector<8x32xf32> -> vector<8x32xf32>
    %264 = arith.addf %263, %29 : vector<8x32xf32>
    %265 = arith.addf %264, %232 : vector<8x32xf32>
    %cst_92 = arith.constant dense<0.000000e+00> : vector<8xf32>
    %266 = vector.multi_reduction <add>, %265, %cst_92 [1] : vector<8x32xf32> to vector<8xf32>
    %267 = vector.shape_cast %266 : vector<8xf32> to vector<8x1xf32>
    %cst_93 = arith.constant 3.200000e+01 : f32
    %268 = vector.broadcast %cst_93 : f32 to vector<8x1xf32>
    %269 = arith.divf %267, %268 : vector<8x1xf32>
    %270 = vector.broadcast %269 : vector<8x1xf32> to vector<8x32xf32>
    %271 = arith.subf %265, %270 : vector<8x32xf32>
    %272 = arith.mulf %271, %271 : vector<8x32xf32>
    %cst_94 = arith.constant dense<0.000000e+00> : vector<8xf32>
    %273 = vector.multi_reduction <add>, %272, %cst_94 [1] : vector<8x32xf32> to vector<8xf32>
    %274 = vector.shape_cast %273 : vector<8xf32> to vector<8x1xf32>
    %cst_95 = arith.constant 3.200000e+01 : f32
    %275 = vector.broadcast %cst_95 : f32 to vector<8x1xf32>
    %276 = arith.divf %274, %275 : vector<8x1xf32>
    %277 = vector.broadcast %269 : vector<8x1xf32> to vector<8x32xf32>
    %278 = arith.subf %265, %277 : vector<8x32xf32>
    %cst_96 = arith.constant 9.99999974E-6 : f32
    %279 = vector.broadcast %cst_96 : f32 to vector<8x1xf32>
    %280 = arith.addf %276, %279 : vector<8x1xf32>
    %281 = math.rsqrt %280 : vector<8x1xf32>
    %282 = vector.broadcast %281 : vector<8x1xf32> to vector<8x32xf32>
    %283 = arith.mulf %278, %282 : vector<8x32xf32>
    %284 = arith.mulf %283, %14 : vector<8x32xf32>
    %285 = arith.addf %284, %17 : vector<8x32xf32>
    %cst_97 = arith.constant dense<0.000000e+00> : vector<8x128xf32>
    %286 = tpu.matmul %285, %32, %cst_97 {dimension_numbers = #tpu.dot_dimension_numbers<[1], [0], [0], [1], [0, 0, 1, 1], [], []>} : vector<8x32xf32>, vector<32x128xf32>, vector<8x128xf32> -> vector<8x128xf32>
    %287 = arith.addf %286, %23 : vector<8x128xf32>
    %cst_98 = arith.constant 5.000000e-01 : f32
    %288 = vector.broadcast %cst_98 : f32 to vector<8x128xf32>
    %289 = arith.mulf %288, %287 : vector<8x128xf32>
    %cst_99 = arith.constant 0.707106769 : f32
    %290 = vector.broadcast %cst_99 : f32 to vector<8x128xf32>
    %291 = arith.mulf %287, %290 : vector<8x128xf32>
    %292 = math.erf %291 : vector<8x128xf32>
    %cst_100 = arith.constant 1.000000e+00 : f32
    %293 = vector.broadcast %cst_100 : f32 to vector<8x128xf32>
    %294 = arith.addf %293, %292 : vector<8x128xf32>
    %295 = arith.mulf %289, %294 : vector<8x128xf32>
    %cst_101 = arith.constant dense<0.000000e+00> : vector<8x32xf32>
    %296 = tpu.matmul %295, %33, %cst_101 {dimension_numbers = #tpu.dot_dimension_numbers<[1], [0], [0], [1], [0, 0, 1, 1], [], []>} : vector<8x128xf32>, vector<128x32xf32>, vector<8x32xf32> -> vector<8x32xf32>
    %297 = arith.addf %296, %20 : vector<8x32xf32>
    %298 = arith.addf %297, %265 : vector<8x32xf32>
    %cst_102 = arith.constant dense<0.000000e+00> : vector<8xf32>
    %299 = vector.multi_reduction <add>, %298, %cst_102 [1] : vector<8x32xf32> to vector<8xf32>
    %300 = vector.shape_cast %299 : vector<8xf32> to vector<8x1xf32>
    %cst_103 = arith.constant 3.200000e+01 : f32
    %301 = vector.broadcast %cst_103 : f32 to vector<8x1xf32>
    %302 = arith.divf %300, %301 : vector<8x1xf32>
    %303 = vector.broadcast %302 : vector<8x1xf32> to vector<8x32xf32>
    %304 = arith.subf %298, %303 : vector<8x32xf32>
    %305 = arith.mulf %304, %304 : vector<8x32xf32>
    %cst_104 = arith.constant dense<0.000000e+00> : vector<8xf32>
    %306 = vector.multi_reduction <add>, %305, %cst_104 [1] : vector<8x32xf32> to vector<8xf32>
    %307 = vector.shape_cast %306 : vector<8xf32> to vector<8x1xf32>
    %cst_105 = arith.constant 3.200000e+01 : f32
    %308 = vector.broadcast %cst_105 : f32 to vector<8x1xf32>
    %309 = arith.divf %307, %308 : vector<8x1xf32>
    %310 = vector.broadcast %302 : vector<8x1xf32> to vector<8x32xf32>
    %311 = arith.subf %298, %310 : vector<8x32xf32>
    %cst_106 = arith.constant 9.99999974E-6 : f32
    %312 = vector.broadcast %cst_106 : f32 to vector<8x1xf32>
    %313 = arith.addf %309, %312 : vector<8x1xf32>
    %314 = math.rsqrt %313 : vector<8x1xf32>
    %315 = vector.broadcast %314 : vector<8x1xf32> to vector<8x32xf32>
    %316 = arith.mulf %311, %315 : vector<8x32xf32>
    %317 = arith.mulf %316, %8 : vector<8x32xf32>
    %318 = arith.addf %317, %11 : vector<8x32xf32>
    %cst_107 = arith.constant dense<0.000000e+00> : vector<32x32xf32>
    %319 = tpu.matmul %30, %318, %cst_107 {dimension_numbers = #tpu.dot_dimension_numbers<[1], [0], [0], [1], [0, 0, 1, 1], [], []>} : vector<32x8xf32>, vector<8x32xf32>, vector<32x32xf32> -> vector<32x32xf32>
    %320 = arith.addf %319, %26 : vector<32x32xf32>
    %cst_108 = arith.constant 5.000000e-01 : f32
    %321 = vector.broadcast %cst_108 : f32 to vector<32x32xf32>
    %322 = arith.mulf %321, %320 : vector<32x32xf32>
    %cst_109 = arith.constant 0.707106769 : f32
    %323 = vector.broadcast %cst_109 : f32 to vector<32x32xf32>
    %324 = arith.mulf %320, %323 : vector<32x32xf32>
    %325 = math.erf %324 : vector<32x32xf32>
    %cst_110 = arith.constant 1.000000e+00 : f32
    %326 = vector.broadcast %cst_110 : f32 to vector<32x32xf32>
    %327 = arith.addf %326, %325 : vector<32x32xf32>
    %328 = arith.mulf %322, %327 : vector<32x32xf32>
    %cst_111 = arith.constant dense<0.000000e+00> : vector<8x32xf32>
    %329 = tpu.matmul %31, %328, %cst_111 {dimension_numbers = #tpu.dot_dimension_numbers<[1], [0], [0], [1], [0, 0, 1, 1], [], []>} : vector<8x32xf32>, vector<32x32xf32>, vector<8x32xf32> -> vector<8x32xf32>
    %330 = arith.addf %329, %29 : vector<8x32xf32>
    %331 = arith.addf %330, %298 : vector<8x32xf32>
    %cst_112 = arith.constant dense<0.000000e+00> : vector<8xf32>
    %332 = vector.multi_reduction <add>, %331, %cst_112 [1] : vector<8x32xf32> to vector<8xf32>
    %333 = vector.shape_cast %332 : vector<8xf32> to vector<8x1xf32>
    %cst_113 = arith.constant 3.200000e+01 : f32
    %334 = vector.broadcast %cst_113 : f32 to vector<8x1xf32>
    %335 = arith.divf %333, %334 : vector<8x1xf32>
    %336 = vector.broadcast %335 : vector<8x1xf32> to vector<8x32xf32>
    %337 = arith.subf %331, %336 : vector<8x32xf32>
    %338 = arith.mulf %337, %337 : vector<8x32xf32>
    %cst_114 = arith.constant dense<0.000000e+00> : vector<8xf32>
    %339 = vector.multi_reduction <add>, %338, %cst_114 [1] : vector<8x32xf32> to vector<8xf32>
    %340 = vector.shape_cast %339 : vector<8xf32> to vector<8x1xf32>
    %cst_115 = arith.constant 3.200000e+01 : f32
    %341 = vector.broadcast %cst_115 : f32 to vector<8x1xf32>
    %342 = arith.divf %340, %341 : vector<8x1xf32>
    %343 = vector.broadcast %335 : vector<8x1xf32> to vector<8x32xf32>
    %344 = arith.subf %331, %343 : vector<8x32xf32>
    %cst_116 = arith.constant 9.99999974E-6 : f32
    %345 = vector.broadcast %cst_116 : f32 to vector<8x1xf32>
    %346 = arith.addf %342, %345 : vector<8x1xf32>
    %347 = math.rsqrt %346 : vector<8x1xf32>
    %348 = vector.broadcast %347 : vector<8x1xf32> to vector<8x32xf32>
    %349 = arith.mulf %344, %348 : vector<8x32xf32>
    %350 = arith.mulf %349, %14 : vector<8x32xf32>
    %351 = arith.addf %350, %17 : vector<8x32xf32>
    %cst_117 = arith.constant dense<0.000000e+00> : vector<8x128xf32>
    %352 = tpu.matmul %351, %32, %cst_117 {dimension_numbers = #tpu.dot_dimension_numbers<[1], [0], [0], [1], [0, 0, 1, 1], [], []>} : vector<8x32xf32>, vector<32x128xf32>, vector<8x128xf32> -> vector<8x128xf32>
    %353 = arith.addf %352, %23 : vector<8x128xf32>
    %cst_118 = arith.constant 5.000000e-01 : f32
    %354 = vector.broadcast %cst_118 : f32 to vector<8x128xf32>
    %355 = arith.mulf %354, %353 : vector<8x128xf32>
    %cst_119 = arith.constant 0.707106769 : f32
    %356 = vector.broadcast %cst_119 : f32 to vector<8x128xf32>
    %357 = arith.mulf %353, %356 : vector<8x128xf32>
    %358 = math.erf %357 : vector<8x128xf32>
    %cst_120 = arith.constant 1.000000e+00 : f32
    %359 = vector.broadcast %cst_120 : f32 to vector<8x128xf32>
    %360 = arith.addf %359, %358 : vector<8x128xf32>
    %361 = arith.mulf %355, %360 : vector<8x128xf32>
    %cst_121 = arith.constant dense<0.000000e+00> : vector<8x32xf32>
    %362 = tpu.matmul %361, %33, %cst_121 {dimension_numbers = #tpu.dot_dimension_numbers<[1], [0], [0], [1], [0, 0, 1, 1], [], []>} : vector<8x128xf32>, vector<128x32xf32>, vector<8x32xf32> -> vector<8x32xf32>
    %363 = arith.addf %362, %20 : vector<8x32xf32>
    %364 = arith.addf %363, %331 : vector<8x32xf32>
    %cst_122 = arith.constant dense<0.000000e+00> : vector<8xf32>
    %365 = vector.multi_reduction <add>, %364, %cst_122 [1] : vector<8x32xf32> to vector<8xf32>
    %366 = vector.shape_cast %365 : vector<8xf32> to vector<8x1xf32>
    %cst_123 = arith.constant 3.200000e+01 : f32
    %367 = vector.broadcast %cst_123 : f32 to vector<8x1xf32>
    %368 = arith.divf %366, %367 : vector<8x1xf32>
    %369 = vector.broadcast %368 : vector<8x1xf32> to vector<8x32xf32>
    %370 = arith.subf %364, %369 : vector<8x32xf32>
    %371 = arith.mulf %370, %370 : vector<8x32xf32>
    %cst_124 = arith.constant dense<0.000000e+00> : vector<8xf32>
    %372 = vector.multi_reduction <add>, %371, %cst_124 [1] : vector<8x32xf32> to vector<8xf32>
    %373 = vector.shape_cast %372 : vector<8xf32> to vector<8x1xf32>
    %cst_125 = arith.constant 3.200000e+01 : f32
    %374 = vector.broadcast %cst_125 : f32 to vector<8x1xf32>
    %375 = arith.divf %373, %374 : vector<8x1xf32>
    %376 = vector.broadcast %368 : vector<8x1xf32> to vector<8x32xf32>
    %377 = arith.subf %364, %376 : vector<8x32xf32>
    %cst_126 = arith.constant 9.99999974E-6 : f32
    %378 = vector.broadcast %cst_126 : f32 to vector<8x1xf32>
    %379 = arith.addf %375, %378 : vector<8x1xf32>
    %380 = math.rsqrt %379 : vector<8x1xf32>
    %381 = vector.broadcast %380 : vector<8x1xf32> to vector<8x32xf32>
    %382 = arith.mulf %377, %381 : vector<8x32xf32>
    %383 = arith.mulf %382, %2 : vector<8x32xf32>
    %384 = arith.addf %383, %5 : vector<8x32xf32>
    %c1_127 = arith.constant 1 : index
    %c0_128 = arith.constant 0 : index
    %c0_129 = arith.constant 0 : index
    %385 = vector.load %arg8[%c1_127, %c0_128, %c0_129] : memref<2x8x32xf32, #tpu.memory_space<vmem>>, vector<1x8x32xf32>
    %386 = vector.shape_cast %385 : vector<1x8x32xf32> to vector<8x32xf32>
    %387 = vector.shape_cast %384 : vector<8x32xf32> to vector<1x8x32xf32>
    tpu.vector_store %arg8[%c1_127, %c0_128, %c0_129], %387 {strides = array<i32>} : memref<2x8x32xf32, #tpu.memory_space<vmem>>, vector<1x8x32xf32>,
    return
  }
  func.func @transform_0(%arg0: i32) -> (i32, i32, i32) {
    %c0_i32 = arith.constant 0 : i32
    %c0_i32_0 = arith.constant 0 : i32
    %c0_i32_1 = arith.constant 0 : i32
    return %arg0, %c0_i32, %c0_i32_0 : i32, i32, i32
  }
  func.func @transform_1(%arg0: i32) -> (i32, i32) {
    %c0_i32 = arith.constant 0 : i32
    %c0_i32_0 = arith.constant 0 : i32
    %c0_i32_1 = arith.constant 0 : i32
    return %c0_i32, %c0_i32_0 : i32, i32
  }
  func.func @transform_2(%arg0: i32) -> (i32, i32) {
    %c0_i32 = arith.constant 0 : i32
    %c0_i32_0 = arith.constant 0 : i32
    %c0_i32_1 = arith.constant 0 : i32
    return %c0_i32, %c0_i32_0 : i32, i32
  }
  func.func @transform_3(%arg0: i32) -> (i32, i32) {
    %c0_i32 = arith.constant 0 : i32
    %c0_i32_0 = arith.constant 0 : i32
    %c0_i32_1 = arith.constant 0 : i32
    return %c0_i32, %c0_i32_0 : i32, i32
  }
  func.func @transform_4(%arg0: i32) -> (i32, i32) {
    %c0_i32 = arith.constant 0 : i32
    %c0_i32_0 = arith.constant 0 : i32
    %c0_i32_1 = arith.constant 0 : i32
    return %c0_i32, %c0_i32_0 : i32, i32
  }
  func.func @transform_5(%arg0: i32) -> (i32, i32) {
    %c0_i32 = arith.constant 0 : i32
    %c0_i32_0 = arith.constant 0 : i32
    %c0_i32_1 = arith.constant 0 : i32
    return %c0_i32, %c0_i32_0 : i32, i32
  }
  func.func @transform_6(%arg0: i32) -> (i32, i32) {
    %c0_i32 = arith.constant 0 : i32
    %c0_i32_0 = arith.constant 0 : i32
    %c0_i32_1 = arith.constant 0 : i32
    return %c0_i32, %c0_i32_0 : i32, i32
  }
  func.func @transform_7(%arg0: i32) -> (i32, i32, i32) {
    %c0_i32 = arith.constant 0 : i32
    %c0_i32_0 = arith.constant 0 : i32
    %c0_i32_1 = arith.constant 0 : i32
    return %arg0, %c0_i32, %c0_i32_0 : i32, i32, i32
  }
}

</mosaic_0001>

<llo_original>
// kernel: tpu_custom_call.1
$region0: #{tpu_custom_call.1}
  #allocation0 [shape = 'u32[]', space=smem, size = 0x4, offset = 0x4, fixed_abs, tag = 'smem constant byte address 0x4 - core index']
  #allocation1 [shape = 'u32[144,128]{1,0:T(1,128)}', space=vmem, size = 0x12000, scoped, tag = 'internal scratch']
  %s0 = inlined_call_operand.vmem [shape: f32[2,8,32], index: 0, kind: input, shape index: {}]
  %s1 = inlined_call_operand.vmem [shape: f32[8,128], index: 1, kind: input, shape index: {}]
  %s2 = inlined_call_operand.vmem [shape: f32[40,1], index: 2, kind: input, shape index: {}]
  %s3 = inlined_call_operand.vmem [shape: f32[32,8], index: 3, kind: input, shape index: {}]
  %s4 = inlined_call_operand.vmem [shape: f32[8,32], index: 4, kind: input, shape index: {}]
  %s5 = inlined_call_operand.vmem [shape: f32[32,128], index: 5, kind: input, shape index: {}]
  %s6 = inlined_call_operand.vmem [shape: f32[128,32], index: 6, kind: input, shape index: {}]
  %s7 = inlined_call_operand.hbm [shape: f32[2,8,32], index: 7, kind: output, shape index: {}]
  %s8 = sld [smem:[#allocation0]]
  $region38: #{tpu_custom_call.1} parent=0
    _
  %s10 = ssub.s32 1, %s8
  %s11 = scalar_select 0, %s10, %s8
  $region1: #{tpu_custom_call.1} parent=0
    #allocation2 [shape = 'u8[8192]{0}', space=vmem, size = 0x2000, scoped, tag = 'output window, operand 0, single buffered']
    #allocation3 [shape = 's32[1]{0}', space=sflag, size = 0x4, scoped, tag = 'scoped memory for tpu_custom_call.1']
    %12 = vsyncpa [#allocation3], 0
    // Predicated region
    $region2: #{tpu_custom_call.1} parent=1 // pred_check
      _
    $region3: #{tpu_custom_call.1} parent=1 // pred_check_branch
      %14 = sbr.rel (0) target = $region5
    $region4: #{tpu_custom_call.1} parent=1 // pred_region
      _
    $region5: #{tpu_custom_call.1} parent=1 // pred_fallthru
      _
    // Predicated region
    $region6: #{tpu_custom_call.1} parent=1 // pred_check
      _
    $region7: #{tpu_custom_call.1} parent=1 // pred_check_branch
      %16 = sbr.rel (0) target = $region9
    $region8: #{tpu_custom_call.1} parent=1 // pred_region
      _
    $region9: #{tpu_custom_call.1} parent=1 // pred_fallthru
      _
    // Predicated region
    $region10: #{tpu_custom_call.1} parent=1 // pred_check
      _
    $region11: #{tpu_custom_call.1} parent=1 // pred_check_branch
      %18 = sbr.rel (0) target = $region13
    $region12: #{tpu_custom_call.1} parent=1 // pred_region
      _
    $region13: #{tpu_custom_call.1} parent=1 // pred_fallthru
      _
    // Predicated region
    $region14: #{tpu_custom_call.1} parent=1 // pred_check
      _
    $region15: #{tpu_custom_call.1} parent=1 // pred_check_branch
      %20 = sbr.rel (0) target = $region17
    $region16: #{tpu_custom_call.1} parent=1 // pred_region
      _
    $region17: #{tpu_custom_call.1} parent=1 // pred_fallthru
      _
    // Predicated region
    $region18: #{tpu_custom_call.1} parent=1 // pred_check
      _
    $region19: #{tpu_custom_call.1} parent=1 // pred_check_branch
      %22 = sbr.rel (0) target = $region21
    $region20: #{tpu_custom_call.1} parent=1 // pred_region
      _
    $region21: #{tpu_custom_call.1} parent=1 // pred_fallthru
      _
    // Predicated region
    $region22: #{tpu_custom_call.1} parent=1 // pred_check
      _
    $region23: #{tpu_custom_call.1} parent=1 // pred_check_branch
      %24 = sbr.rel (0) target = $region25
    $region24: #{tpu_custom_call.1} parent=1 // pred_region
      _
    $region25: #{tpu_custom_call.1} parent=1 // pred_fallthru
      _
    // Predicated region
    $region26: #{tpu_custom_call.1} parent=1 // pred_check
      _
    $region27: #{tpu_custom_call.1} parent=1 // pred_check_branch
      %26 = sbr.rel (0) target = $region29
    $region28: #{tpu_custom_call.1} parent=1 // pred_region
      _
    $region29: #{tpu_custom_call.1} parent=1 // pred_fallthru
      _
    %v27 = vld [vmem:[%s1] sm:$0x1]
    %v28 = vlaneseq
    %v29 = vshrl.u32 %v28, 7
    %v30 = vsub.s32 0, %v29
    %v31 = vrot.slane %v27, %v30
    %v32 = vld [vmem:[%s1 + $0x1] sm:$0x1]
    %v33 = vlaneseq
    %v34 = vshrl.u32 %v33, 7
    %v35 = vsub.s32 0, %v34
    %v36 = vrot.slane %v32, %v35
    %v37 = vld [vmem:[%s1 + $0x2] sm:$0x1]
    %v38 = vlaneseq
    %v39 = vshrl.u32 %v38, 7
    %v40 = vsub.s32 0, %v39
    %v41 = vrot.slane %v37, %v40
    %v42 = vld [vmem:[%s1 + $0x3] sm:$0x1]
    %v43 = vlaneseq
    %v44 = vshrl.u32 %v43, 7
    %v45 = vsub.s32 0, %v44
    %v46 = vrot.slane %v42, %v45
    %v47 = vld [vmem:[%s1 + $0x4] sm:$0x1]
    %v48 = vlaneseq
    %v49 = vshrl.u32 %v48, 7
    %v50 = vsub.s32 0, %v49
    %v51 = vrot.slane %v47, %v50
    %v52 = vld [vmem:[%s1 + $0x5] sm:$0x1]
    %v53 = vlaneseq
    %v54 = vshrl.u32 %v53, 7
    %v55 = vsub.s32 0, %v54
    %v56 = vrot.slane %v52, %v55
    %v57 = vld [vmem:[%s1 + $0x6] sm:$0x1]
    %v58 = vlaneseq
    %v59 = vshrl.u32 %v58, 7
    %v60 = vsub.s32 0, %v59
    %v61 = vrot.slane %v57, %v60
    %v62 = vld [vmem:[%s1 + $0x7] sm:$0x1]
    %v63 = vlaneseq
    %v64 = vshrl.u32 %v63, 7
    %v65 = vsub.s32 0, %v64
    %v66 = vrot.slane %v62, %v65
    %v67 = vld [vmem:[%s2] sm:$0xff]
    %v68 = vld [vmem:[%s2 + $0x8] sm:$0xff]
    %v69 = vld [vmem:[%s2 + $0x10] sm:$0xff]
    %v70 = vld [vmem:[%s2 + $0x18] sm:$0xff]
    %72 = vset.pattern.permute.xlu0 0
    %73 = vperm.xlu0 %72, %v67
    %v74 = vpop.permute.xlu0 %73
    %77 = vset.pattern.permute.xlu0 0
    %78 = vperm.xlu0 %77, %v68
    %v79 = vpop.permute.xlu0 %78
    %82 = vset.pattern.permute.xlu0 0
    %83 = vperm.xlu0 %82, %v69
    %v84 = vpop.permute.xlu0 %83
    %87 = vset.pattern.permute.xlu0 0
    %88 = vperm.xlu0 %87, %v70
    %v89 = vpop.permute.xlu0 %88
    %v91 = vld [vmem:[%s2 + $0x20] sm:$0xff]
    %93 = vset.pattern.permute.xlu0 0
    %94 = vperm.xlu0 %93, %v91
    %v95 = vpop.permute.xlu0 %94
    %v97 = vld [vmem:[%s3] sm:$0xff]
    %v98 = vld [vmem:[%s3 + $0x8] sm:$0xff]
    %v99 = vld [vmem:[%s3 + $0x10] sm:$0xff]
    %v100 = vld [vmem:[%s3 + $0x18] sm:$0xff]
    %v101 = vld [vmem:[%s4] sm:$0xff]
    %v102 = vld [vmem:[%s5] sm:$0xff]
    %v103 = vld [vmem:[%s5 + $0x8] sm:$0xff]
    %v104 = vld [vmem:[%s5 + $0x10] sm:$0xff]
    %v105 = vld [vmem:[%s5 + $0x18] sm:$0xff]
    %v106 = vld [vmem:[%s6] sm:$0xff]
    %v107 = vld [vmem:[%s6 + $0x8] sm:$0xff]
    %v108 = vld [vmem:[%s6 + $0x10] sm:$0xff]
    %v109 = vld [vmem:[%s6 + $0x18] sm:$0xff]
    %v110 = vld [vmem:[%s6 + $0x20] sm:$0xff]
    %v111 = vld [vmem:[%s6 + $0x28] sm:$0xff]
    %v112 = vld [vmem:[%s6 + $0x30] sm:$0xff]
    %v113 = vld [vmem:[%s6 + $0x38] sm:$0xff]
    %v114 = vld [vmem:[%s6 + $0x40] sm:$0xff]
    %v115 = vld [vmem:[%s6 + $0x48] sm:$0xff]
    %v116 = vld [vmem:[%s6 + $0x50] sm:$0xff]
    %v117 = vld [vmem:[%s6 + $0x58] sm:$0xff]
    %v118 = vld [vmem:[%s6 + $0x60] sm:$0xff]
    %v119 = vld [vmem:[%s6 + $0x68] sm:$0xff]
    %v120 = vld [vmem:[%s6 + $0x70] sm:$0xff]
    %v121 = vld [vmem:[%s6 + $0x78] sm:$0xff]
    %v122 = vld [vmem:[%s0] sm:$0xff]
    %vm123 = vcmask 261120
    %v124 = vsel %vm123, %v122, 0.0
    %125 = vadd.xlane.f32.xlu0 %v124
    %v126 = vpop.xlane.xlu0 %125
    %v127 = vrcp.pop 32.0
    %v128 = vmul.f32 %v126, %v127
    %v129 = vsub.f32 %v122, %v128
    %v130 = vmul.f32 %v129, %v129
    %v131 = vsel %vm123, %v130, 0.0
    %132 = vadd.xlane.f32.xlu0 %v131
    %v133 = vpop.xlane.xlu0 %132
    %v134 = vmul.f32 %v133, %v127
    %v135 = vadd.f32 %v134, 1e-05
    %v136 = vrsqrt.pop %v135
    %v137 = vmul.f32 %v129, %v136
    %v138 = vmul.f32 %v137, %v31
    %v139 = vadd.f32 %v138, %v36
    %v140 = vsel %vm123, %v139, 0.0
    %141 = vadd.xlane.f32.xlu0 %v140
    %v142 = vpop.xlane.xlu0 %141
    %v143 = vmul.f32 %v142, %v127
    %v144 = vsub.f32 %v139, %v143
    %v145 = vmul.f32 %v144, %v144
    %v146 = vsel %vm123, %v145, 0.0
    %147 = vadd.xlane.f32.xlu0 %v146
    %v148 = vpop.xlane.xlu0 %147
    %v149 = vmul.f32 %v148, %v127
    %v150 = vadd.f32 %v149, 1e-05
    %v151 = vrsqrt.pop %v150
    %v152 = vmul.f32 %v144, %v151
    %v153 = vmul.f32 %v152, %v41
    %v154 = vadd.f32 %v153, %v46
    %vm155 = vcmask 64512
    %v157 = vsel %vm155, %v97, 0
    %v160 = vsel %vm155, %v98, 0
    %v163 = vsel %vm155, %v99, 0
    %v166 = vsel %vm155, %v100, 0
    %168 = vmatprep.subr.mxu0 0.0
    %169 = vmatpush1.msra.mxu0 0.0
    %170 = vmatprep.subr.mxu0 0.0
    %171 = vmatpush1.msra.mxu0 0.0
    %172 = vmatprep.subr.mxu0 0.0
    %173 = vmatpush1.msra.mxu0 0.0
    %174 = vmatprep.subr.mxu0 0.0
    %175 = vmatpush1.msra.mxu0 0.0
    %176 = vmatprep.subr.mxu0 0.0
    %177 = vmatpush1.msra.mxu0 0.0
    %178 = vmatprep.subr.mxu0 0.0
    %179 = vmatpush1.msra.mxu0 0.0
    %180 = vmatprep.subr.mxu0 0.0
    %181 = vmatpush1.msra.mxu0 0.0
    %182 = vmatprep.subr.mxu0 0.0
    %183 = vmatpush1.msra.mxu0 0.0
    %184 = vmatprep.subr.mxu0 0.0
    %185 = vmatpush1.msra.mxu0 0.0
    %186 = vmatprep.subr.mxu0 0.0
    %187 = vmatpush1.msra.mxu0 0.0
    %188 = vmatprep.subr.mxu0 0.0
    %189 = vmatpush1.msra.mxu0 0.0
    %190 = vmatprep.subr.mxu0 0.0
    %191 = vmatpush1.msra.mxu0 0.0
    %192 = vmatprep.subr.mxu0 0.0
    %193 = vmatpush1.msra.mxu0 0.0
    %194 = vmatprep.subr.mxu0 0.0
    %195 = vmatpush1.msra.mxu0 0.0
    %196 = vmatprep.subr.mxu0 0.0
    %197 = vmatpush1.msra.mxu0 0.0
    %198 = vmatprep.subr.mxu0 0.0
    %199 = vmatpush1.msra.mxu0 %v154
    %200 = vmatprep.subr.mxu0 0.0
    %201 = vmatpush2.msra.mxu0 0.0
    %202 = vmatprep.subr.mxu0 0.0
    %203 = vmatpush2.msra.mxu0 0.0
    %204 = vmatprep.subr.mxu0 0.0
    %205 = vmatpush2.msra.mxu0 0.0
    %206 = vmatprep.subr.mxu0 0.0
    %207 = vmatpush2.msra.mxu0 0.0
    %208 = vmatprep.subr.mxu0 0.0
    %209 = vmatpush2.msra.mxu0 0.0
    %210 = vmatprep.subr.mxu0 0.0
    %211 = vmatpush2.msra.mxu0 0.0
    %212 = vmatprep.subr.mxu0 0.0
    %213 = vmatpush2.msra.mxu0 0.0
    %214 = vmatprep.subr.mxu0 0.0
    %215 = vmatpush2.msra.mxu0 0.0
    %216 = vmatprep.subr.mxu0 0.0
    %217 = vmatpush2.msra.mxu0 0.0
    %218 = vmatprep.subr.mxu0 0.0
    %219 = vmatpush2.msra.mxu0 0.0
    %220 = vmatprep.subr.mxu0 0.0
    %221 = vmatpush2.msra.mxu0 0.0
    %222 = vmatprep.subr.mxu0 0.0
    %223 = vmatpush2.msra.mxu0 0.0
    %224 = vmatprep.subr.mxu0 0.0
    %225 = vmatpush2.msra.mxu0 0.0
    %226 = vmatprep.subr.mxu0 0.0
    %227 = vmatpush2.msra.mxu0 0.0
    %228 = vmatprep.subr.mxu0 0.0
    %229 = vmatpush2.msra.mxu0 0.0
    %230 = vmatprep.subr.mxu0 0.0
    %231 = vmatpush2.msra.mxu0 0.0
    %232 = vmatprep.mubr.f32.mxu0 0.0
    %233 = vmatmul.mubr.f32.gmra.mxu0 %v157
    %v234 = vpop.f32.mrf.mxu0
    %v235 = vadd.f32 %v74, %v234
    %v236 = vpop.f32.mrf.mxu0
    %237 = vmatprep.mubr.f32.mxu0 0.0
    %238 = vmatmul.mubr.f32.gmra.mxu0 %v160
    %v239 = vpop.f32.mrf.mxu0
    %v240 = vadd.f32 %v79, %v239
    %v241 = vpop.f32.mrf.mxu0
    %242 = vmatprep.mubr.f32.mxu0 0.0
    %243 = vmatmul.mubr.f32.gmra.mxu0 %v163
    %v244 = vpop.f32.mrf.mxu0
    %v245 = vadd.f32 %v84, %v244
    %v246 = vpop.f32.mrf.mxu0
    %247 = vmatprep.mubr.f32.mxu0 0.0
    %248 = vmatmul.mubr.f32.gmra.mxu0 %v166
    %v249 = vpop.f32.mrf.mxu0
    %v250 = vadd.f32 %v89, %v249
    %v251 = vpop.f32.mrf.mxu0
    %252 = vdwg.mxu0
    %v253 = vmul.f32 %v235, 0.5
    %v254 = vmul.f32 %v240, 0.5
    %v255 = vmul.f32 %v245, 0.5
    %v256 = vmul.f32 %v250, 0.5
    %v257 = vmul.f32 %v235, 0.70710677
    %v258 = vmul.f32 %v240, 0.70710677
    %v259 = vmul.f32 %v245, 0.70710677
    %v260 = vmul.f32 %v250, 0.70710677
    %v261 = verf.f32.pop %v257
    %v262 = verf.f32.pop %v258
    %v263 = verf.f32.pop %v259
    %v264 = verf.f32.pop %v260
    %v265 = vadd.f32 %v261, 1.0
    %v266 = vadd.f32 %v262, 1.0
    %v267 = vadd.f32 %v263, 1.0
    %v268 = vadd.f32 %v264, 1.0
    %v269 = vmul.f32 %v253, %v265
    %v270 = vmul.f32 %v254, %v266
    %v271 = vmul.f32 %v255, %v267
    %v272 = vmul.f32 %v256, %v268
    %v274 = vsel %vm123, %v101, 0
    %276 = vmatprep.subr.mxu0 0.0
    %277 = vmatpush1.msra.mxu0 0.0
    %278 = vmatprep.subr.mxu0 0.0
    %279 = vmatpush1.msra.mxu0 0.0
    %280 = vmatprep.subr.mxu0 0.0
    %281 = vmatpush1.msra.mxu0 0.0
    %282 = vmatprep.subr.mxu0 0.0
    %283 = vmatpush1.msra.mxu0 0.0
    %284 = vmatprep.subr.mxu0 0.0
    %285 = vmatpush1.msra.mxu0 0.0
    %286 = vmatprep.subr.mxu0 0.0
    %287 = vmatpush1.msra.mxu0 0.0
    %288 = vmatprep.subr.mxu0 0.0
    %289 = vmatpush1.msra.mxu0 0.0
    %290 = vmatprep.subr.mxu0 0.0
    %291 = vmatpush1.msra.mxu0 0.0
    %292 = vmatprep.subr.mxu0 0.0
    %293 = vmatpush1.msra.mxu0 0.0
    %294 = vmatprep.subr.mxu0 0.0
    %295 = vmatpush1.msra.mxu0 0.0
    %296 = vmatprep.subr.mxu0 0.0
    %297 = vmatpush1.msra.mxu0 0.0
    %298 = vmatprep.subr.mxu0 0.0
    %299 = vmatpush1.msra.mxu0 0.0
    %300 = vmatprep.subr.mxu0 0.0
    %301 = vmatpush1.msra.mxu0 %v272
    %302 = vmatprep.subr.mxu0 0.0
    %303 = vmatpush1.msra.mxu0 %v271
    %304 = vmatprep.subr.mxu0 0.0
    %305 = vmatpush1.msra.mxu0 %v270
    %306 = vmatprep.subr.mxu0 0.0
    %307 = vmatpush1.msra.mxu0 %v269
    %308 = vmatprep.subr.mxu0 0.0
    %309 = vmatpush2.msra.mxu0 0.0
    %310 = vmatprep.subr.mxu0 0.0
    %311 = vmatpush2.msra.mxu0 0.0
    %312 = vmatprep.subr.mxu0 0.0
    %313 = vmatpush2.msra.mxu0 0.0
    %314 = vmatprep.subr.mxu0 0.0
    %315 = vmatpush2.msra.mxu0 0.0
    %316 = vmatprep.subr.mxu0 0.0
    %317 = vmatpush2.msra.mxu0 0.0
    %318 = vmatprep.subr.mxu0 0.0
    %319 = vmatpush2.msra.mxu0 0.0
    %320 = vmatprep.subr.mxu0 0.0
    %321 = vmatpush2.msra.mxu0 0.0
    %322 = vmatprep.subr.mxu0 0.0
    %323 = vmatpush2.msra.mxu0 0.0
    %324 = vmatprep.subr.mxu0 0.0
    %325 = vmatpush2.msra.mxu0 0.0
    %326 = vmatprep.subr.mxu0 0.0
    %327 = vmatpush2.msra.mxu0 0.0
    %328 = vmatprep.subr.mxu0 0.0
    %329 = vmatpush2.msra.mxu0 0.0
    %330 = vmatprep.subr.mxu0 0.0
    %331 = vmatpush2.msra.mxu0 0.0
    %332 = vmatprep.subr.mxu0 0.0
    %333 = vmatpush2.msra.mxu0 0.0
    %334 = vmatprep.subr.mxu0 0.0
    %335 = vmatpush2.msra.mxu0 0.0
    %336 = vmatprep.subr.mxu0 0.0
    %337 = vmatpush2.msra.mxu0 0.0
    %338 = vmatprep.subr.mxu0 0.0
    %339 = vmatpush2.msra.mxu0 0.0
    %340 = vmatprep.mubr.f32.mxu0 0.0
    %341 = vmatmul.mubr.f32.gmra.mxu0 %v274
    %v342 = vpop.f32.mrf.mxu0
    %v343 = vadd.f32 %v95, %v342
    %v344 = vpop.f32.mrf.mxu0
    %345 = vdwg.mxu0
    %v346 = vadd.f32 %v343, %v139
    %v347 = vsel %vm123, %v346, 0.0
    %348 = vadd.xlane.f32.xlu0 %v347
    %v349 = vpop.xlane.xlu0 %348
    %v350 = vmul.f32 %v349, %v127
    %v351 = vsub.f32 %v346, %v350
    %v352 = vmul.f32 %v351, %v351
    %v353 = vsel %vm123, %v352, 0.0
    %354 = vadd.xlane.f32.xlu0 %v353
    %v355 = vpop.xlane.xlu0 %354
    %v356 = vmul.f32 %v355, %v127
    %v357 = vadd.f32 %v356, 1e-05
    %v358 = vrsqrt.pop %v357
    %v359 = vmul.f32 %v351, %v358
    %v360 = vmul.f32 %v359, %v51
    %v361 = vadd.f32 %v360, %v56
    %v363 = vsel %vm123, %v361, 0
    %365 = vmatprep.subr.mxu0 0.0
    %366 = vmatpush1.msra.mxu0 0.0
    %367 = vmatprep.subr.mxu0 0.0
    %368 = vmatpush1.msra.mxu0 0.0
    %369 = vmatprep.subr.mxu0 0.0
    %370 = vmatpush1.msra.mxu0 0.0
    %371 = vmatprep.subr.mxu0 0.0
    %372 = vmatpush1.msra.mxu0 0.0
    %373 = vmatprep.subr.mxu0 0.0
    %374 = vmatpush1.msra.mxu0 0.0
    %375 = vmatprep.subr.mxu0 0.0
    %376 = vmatpush1.msra.mxu0 0.0
    %377 = vmatprep.subr.mxu0 0.0
    %378 = vmatpush1.msra.mxu0 0.0
    %379 = vmatprep.subr.mxu0 0.0
    %380 = vmatpush1.msra.mxu0 0.0
    %381 = vmatprep.subr.mxu0 0.0
    %382 = vmatpush1.msra.mxu0 0.0
    %383 = vmatprep.subr.mxu0 0.0
    %384 = vmatpush1.msra.mxu0 0.0
    %385 = vmatprep.subr.mxu0 0.0
    %386 = vmatpush1.msra.mxu0 0.0
    %387 = vmatprep.subr.mxu0 0.0
    %388 = vmatpush1.msra.mxu0 0.0
    %389 = vmatprep.subr.mxu0 0.0
    %390 = vmatpush1.msra.mxu0 %v105
    %391 = vmatprep.subr.mxu0 0.0
    %392 = vmatpush1.msra.mxu0 %v104
    %393 = vmatprep.subr.mxu0 0.0
    %394 = vmatpush1.msra.mxu0 %v103
    %395 = vmatprep.subr.mxu0 0.0
    %396 = vmatpush1.msra.mxu0 %v102
    %397 = vmatprep.subr.mxu0 0.0
    %398 = vmatpush2.msra.mxu0 0.0
    %399 = vmatprep.subr.mxu0 0.0
    %400 = vmatpush2.msra.mxu0 0.0
    %401 = vmatprep.subr.mxu0 0.0
    %402 = vmatpush2.msra.mxu0 0.0
    %403 = vmatprep.subr.mxu0 0.0
    %404 = vmatpush2.msra.mxu0 0.0
    %405 = vmatprep.subr.mxu0 0.0
    %406 = vmatpush2.msra.mxu0 0.0
    %407 = vmatprep.subr.mxu0 0.0
    %408 = vmatpush2.msra.mxu0 0.0
    %409 = vmatprep.subr.mxu0 0.0
    %410 = vmatpush2.msra.mxu0 0.0
    %411 = vmatprep.subr.mxu0 0.0
    %412 = vmatpush2.msra.mxu0 0.0
    %413 = vmatprep.subr.mxu0 0.0
    %414 = vmatpush2.msra.mxu0 0.0
    %415 = vmatprep.subr.mxu0 0.0
    %416 = vmatpush2.msra.mxu0 0.0
    %417 = vmatprep.subr.mxu0 0.0
    %418 = vmatpush2.msra.mxu0 0.0
    %419 = vmatprep.subr.mxu0 0.0
    %420 = vmatpush2.msra.mxu0 0.0
    %421 = vmatprep.subr.mxu0 0.0
    %422 = vmatpush2.msra.mxu0 0.0
    %423 = vmatprep.subr.mxu0 0.0
    %424 = vmatpush2.msra.mxu0 0.0
    %425 = vmatprep.subr.mxu0 0.0
    %426 = vmatpush2.msra.mxu0 0.0
    %427 = vmatprep.subr.mxu0 0.0
    %428 = vmatpush2.msra.mxu0 0.0
    %429 = vmatprep.mubr.f32.mxu0 0.0
    %430 = vmatmul.mubr.f32.gmra.mxu0 %v363
    %v431 = vpop.f32.mrf.mxu0
    %v432 = vadd.f32 %v66, %v431
    %v433 = vpop.f32.mrf.mxu0
    %434 = vdwg.mxu0
    %v435 = vmul.f32 %v432, 0.5
    %v436 = vmul.f32 %v432, 0.70710677
    %v437 = verf.f32.pop %v436
    %v438 = vadd.f32 %v437, 1.0
    %v439 = vmul.f32 %v435, %v438
    %440 = vmatprep.subr.mxu0 0.0
    %441 = vmatpush1.msra.mxu0 %v121
    %442 = vmatprep.subr.mxu0 0.0
    %443 = vmatpush1.msra.mxu0 %v120
    %444 = vmatprep.subr.mxu0 0.0
    %445 = vmatpush1.msra.mxu0 %v119
    %446 = vmatprep.subr.mxu0 0.0
    %447 = vmatpush1.msra.mxu0 %v118
    %448 = vmatprep.subr.mxu0 0.0
    %449 = vmatpush1.msra.mxu0 %v117
    %450 = vmatprep.subr.mxu0 0.0
    %451 = vmatpush1.msra.mxu0 %v116
    %452 = vmatprep.subr.mxu0 0.0
    %453 = vmatpush1.msra.mxu0 %v115
    %454 = vmatprep.subr.mxu0 0.0
    %455 = vmatpush1.msra.mxu0 %v114
    %456 = vmatprep.subr.mxu0 0.0
    %457 = vmatpush1.msra.mxu0 %v113
    %458 = vmatprep.subr.mxu0 0.0
    %459 = vmatpush1.msra.mxu0 %v112
    %460 = vmatprep.subr.mxu0 0.0
    %461 = vmatpush1.msra.mxu0 %v111
    %462 = vmatprep.subr.mxu0 0.0
    %463 = vmatpush1.msra.mxu0 %v110
    %464 = vmatprep.subr.mxu0 0.0
    %465 = vmatpush1.msra.mxu0 %v109
    %466 = vmatprep.subr.mxu0 0.0
    %467 = vmatpush1.msra.mxu0 %v108
    %468 = vmatprep.subr.mxu0 0.0
    %469 = vmatpush1.msra.mxu0 %v107
    %470 = vmatprep.subr.mxu0 0.0
    %471 = vmatpush1.msra.mxu0 %v106
    %472 = vmatprep.subr.mxu0 0.0
    %473 = vmatpush2.msra.mxu0 0.0
    %474 = vmatprep.subr.mxu0 0.0
    %475 = vmatpush2.msra.mxu0 0.0
    %476 = vmatprep.subr.mxu0 0.0
    %477 = vmatpush2.msra.mxu0 0.0
    %478 = vmatprep.subr.mxu0 0.0
    %479 = vmatpush2.msra.mxu0 0.0
    %480 = vmatprep.subr.mxu0 0.0
    %481 = vmatpush2.msra.mxu0 0.0
    %482 = vmatprep.subr.mxu0 0.0
    %483 = vmatpush2.msra.mxu0 0.0
    %484 = vmatprep.subr.mxu0 0.0
    %485 = vmatpush2.msra.mxu0 0.0
    %486 = vmatprep.subr.mxu0 0.0
    %487 = vmatpush2.msra.mxu0 0.0
    %488 = vmatprep.subr.mxu0 0.0
    %489 = vmatpush2.msra.mxu0 0.0
    %490 = vmatprep.subr.mxu0 0.0
    %491 = vmatpush2.msra.mxu0 0.0
    %492 = vmatprep.subr.mxu0 0.0
    %493 = vmatpush2.msra.mxu0 0.0
    %494 = vmatprep.subr.mxu0 0.0
    %495 = vmatpush2.msra.mxu0 0.0
    %496 = vmatprep.subr.mxu0 0.0
    %497 = vmatpush2.msra.mxu0 0.0
    %498 = vmatprep.subr.mxu0 0.0
    %499 = vmatpush2.msra.mxu0 0.0
    %500 = vmatprep.subr.mxu0 0.0
    %501 = vmatpush2.msra.mxu0 0.0
    %502 = vmatprep.subr.mxu0 0.0
    %503 = vmatpush2.msra.mxu0 0.0
    %504 = vmatprep.mubr.f32.mxu0 0.0
    %505 = vmatmul.mubr.f32.gmra.mxu0 %v439
    %v506 = vpop.f32.mrf.mxu0
    %v507 = vadd.f32 %v61, %v506
    %v508 = vpop.f32.mrf.mxu0
    %509 = vdwg.mxu0
    %v510 = vadd.f32 %v507, %v346
    %v511 = vsel %vm123, %v510, 0.0
    %512 = vadd.xlane.f32.xlu0 %v511
    %v513 = vpop.xlane.xlu0 %512
    %v514 = vmul.f32 %v513, %v127
    %v515 = vsub.f32 %v510, %v514
    %v516 = vmul.f32 %v515, %v515
    %v517 = vsel %vm123, %v516, 0.0
    %518 = vadd.xlane.f32.xlu0 %v517
    %v519 = vpop.xlane.xlu0 %518
    %v520 = vmul.f32 %v519, %v127
    %v521 = vadd.f32 %v520, 1e-05
    %v522 = vrsqrt.pop %v521
    %v523 = vmul.f32 %v515, %v522
    %v524 = vmul.f32 %v523, %v41
    %v525 = vadd.f32 %v524, %v46
    %526 = vmatprep.subr.mxu0 0.0
    %527 = vmatpush1.msra.mxu0 0.0
    %528 = vmatprep.subr.mxu0 0.0
    %529 = vmatpush1.msra.mxu0 0.0
    %530 = vmatprep.subr.mxu0 0.0
    %531 = vmatpush1.msra.mxu0 0.0
    %532 = vmatprep.subr.mxu0 0.0
    %533 = vmatpush1.msra.mxu0 0.0
    %534 = vmatprep.subr.mxu0 0.0
    %535 = vmatpush1.msra.mxu0 0.0
    %536 = vmatprep.subr.mxu0 0.0
    %537 = vmatpush1.msra.mxu0 0.0
    %538 = vmatprep.subr.mxu0 0.0
    %539 = vmatpush1.msra.mxu0 0.0
    %540 = vmatprep.subr.mxu0 0.0
    %541 = vmatpush1.msra.mxu0 0.0
    %542 = vmatprep.subr.mxu0 0.0
    %543 = vmatpush1.msra.mxu0 0.0
    %544 = vmatprep.subr.mxu0 0.0
    %545 = vmatpush1.msra.mxu0 0.0
    %546 = vmatprep.subr.mxu0 0.0
    %547 = vmatpush1.msra.mxu0 0.0
    %548 = vmatprep.subr.mxu0 0.0
    %549 = vmatpush1.msra.mxu0 0.0
    %550 = vmatprep.subr.mxu0 0.0
    %551 = vmatpush1.msra.mxu0 0.0
    %552 = vmatprep.subr.mxu0 0.0
    %553 = vmatpush1.msra.mxu0 0.0
    %554 = vmatprep.subr.mxu0 0.0
    %555 = vmatpush1.msra.mxu0 0.0
    %556 = vmatprep.subr.mxu0 0.0
    %557 = vmatpush1.msra.mxu0 %v525
    %558 = vmatprep.subr.mxu0 0.0
    %559 = vmatpush2.msra.mxu0 0.0
    %560 = vmatprep.subr.mxu0 0.0
    %561 = vmatpush2.msra.mxu0 0.0
    %562 = vmatprep.subr.mxu0 0.0
    %563 = vmatpush2.msra.mxu0 0.0
    %564 = vmatprep.subr.mxu0 0.0
    %565 = vmatpush2.msra.mxu0 0.0
    %566 = vmatprep.subr.mxu0 0.0
    %567 = vmatpush2.msra.mxu0 0.0
    %568 = vmatprep.subr.mxu0 0.0
    %569 = vmatpush2.msra.mxu0 0.0
    %570 = vmatprep.subr.mxu0 0.0
    %571 = vmatpush2.msra.mxu0 0.0
    %572 = vmatprep.subr.mxu0 0.0
    %573 = vmatpush2.msra.mxu0 0.0
    %574 = vmatprep.subr.mxu0 0.0
    %575 = vmatpush2.msra.mxu0 0.0
    %576 = vmatprep.subr.mxu0 0.0
    %577 = vmatpush2.msra.mxu0 0.0
    %578 = vmatprep.subr.mxu0 0.0
    %579 = vmatpush2.msra.mxu0 0.0
    %580 = vmatprep.subr.mxu0 0.0
    %581 = vmatpush2.msra.mxu0 0.0
    %582 = vmatprep.subr.mxu0 0.0
    %583 = vmatpush2.msra.mxu0 0.0
    %584 = vmatprep.subr.mxu0 0.0
    %585 = vmatpush2.msra.mxu0 0.0
    %586 = vmatprep.subr.mxu0 0.0
    %587 = vmatpush2.msra.mxu0 0.0
    %588 = vmatprep.subr.mxu0 0.0
    %589 = vmatpush2.msra.mxu0 0.0
    %590 = vmatprep.mubr.f32.mxu0 0.0
    %591 = vmatmul.mubr.f32.gmra.mxu0 %v157
    %v592 = vpop.f32.mrf.mxu0
    %v593 = vadd.f32 %v74, %v592
    %v594 = vpop.f32.mrf.mxu0
    %595 = vmatprep.mubr.f32.mxu0 0.0
    %596 = vmatmul.mubr.f32.gmra.mxu0 %v160
    %v597 = vpop.f32.mrf.mxu0
    %v598 = vadd.f32 %v79, %v597
    %v599 = vpop.f32.mrf.mxu0
    %600 = vmatprep.mubr.f32.mxu0 0.0
    %601 = vmatmul.mubr.f32.gmra.mxu0 %v163
    %v602 = vpop.f32.mrf.mxu0
    %v603 = vadd.f32 %v84, %v602
    %v604 = vpop.f32.mrf.mxu0
    %605 = vmatprep.mubr.f32.mxu0 0.0
    %606 = vmatmul.mubr.f32.gmra.mxu0 %v166
    %v607 = vpop.f32.mrf.mxu0
    %v608 = vadd.f32 %v89, %v607
    %v609 = vpop.f32.mrf.mxu0
    %610 = vdwg.mxu0
    %v611 = vmul.f32 %v593, 0.5
    %v612 = vmul.f32 %v598, 0.5
    %v613 = vmul.f32 %v603, 0.5
    %v614 = vmul.f32 %v608, 0.5
    %v615 = vmul.f32 %v593, 0.70710677
    %v616 = vmul.f32 %v598, 0.70710677
    %v617 = vmul.f32 %v603, 0.70710677
    %v618 = vmul.f32 %v608, 0.70710677
    %v619 = verf.f32.pop %v615
    %v620 = verf.f32.pop %v616
    %v621 = verf.f32.pop %v617
    %v622 = verf.f32.pop %v618
    %v623 = vadd.f32 %v619, 1.0
    %v624 = vadd.f32 %v620, 1.0
    %v625 = vadd.f32 %v621, 1.0
    %v626 = vadd.f32 %v622, 1.0
    %v627 = vmul.f32 %v611, %v623
    %v628 = vmul.f32 %v612, %v624
    %v629 = vmul.f32 %v613, %v625
    %v630 = vmul.f32 %v614, %v626
    %631 = vmatprep.subr.mxu0 0.0
    %632 = vmatpush1.msra.mxu0 0.0
    %633 = vmatprep.subr.mxu0 0.0
    %634 = vmatpush1.msra.mxu0 0.0
    %635 = vmatprep.subr.mxu0 0.0
    %636 = vmatpush1.msra.mxu0 0.0
    %637 = vmatprep.subr.mxu0 0.0
    %638 = vmatpush1.msra.mxu0 0.0
    %639 = vmatprep.subr.mxu0 0.0
    %640 = vmatpush1.msra.mxu0 0.0
    %641 = vmatprep.subr.mxu0 0.0
    %642 = vmatpush1.msra.mxu0 0.0
    %643 = vmatprep.subr.mxu0 0.0
    %644 = vmatpush1.msra.mxu0 0.0
    %645 = vmatprep.subr.mxu0 0.0
    %646 = vmatpush1.msra.mxu0 0.0
    %647 = vmatprep.subr.mxu0 0.0
    %648 = vmatpush1.msra.mxu0 0.0
    %649 = vmatprep.subr.mxu0 0.0
    %650 = vmatpush1.msra.mxu0 0.0
    %651 = vmatprep.subr.mxu0 0.0
    %652 = vmatpush1.msra.mxu0 0.0
    %653 = vmatprep.subr.mxu0 0.0
    %654 = vmatpush1.msra.mxu0 0.0
    %655 = vmatprep.subr.mxu0 0.0
    %656 = vmatpush1.msra.mxu0 %v630
    %657 = vmatprep.subr.mxu0 0.0
    %658 = vmatpush1.msra.mxu0 %v629
    %659 = vmatprep.subr.mxu0 0.0
    %660 = vmatpush1.msra.mxu0 %v628
    %661 = vmatprep.subr.mxu0 0.0
    %662 = vmatpush1.msra.mxu0 %v627
    %663 = vmatprep.subr.mxu0 0.0
    %664 = vmatpush2.msra.mxu0 0.0
    %665 = vmatprep.subr.mxu0 0.0
    %666 = vmatpush2.msra.mxu0 0.0
    %667 = vmatprep.subr.mxu0 0.0
    %668 = vmatpush2.msra.mxu0 0.0
    %669 = vmatprep.subr.mxu0 0.0
    %670 = vmatpush2.msra.mxu0 0.0
    %671 = vmatprep.subr.mxu0 0.0
    %672 = vmatpush2.msra.mxu0 0.0
    %673 = vmatprep.subr.mxu0 0.0
    %674 = vmatpush2.msra.mxu0 0.0
    %675 = vmatprep.subr.mxu0 0.0
    %676 = vmatpush2.msra.mxu0 0.0
    %677 = vmatprep.subr.mxu0 0.0
    %678 = vmatpush2.msra.mxu0 0.0
    %679 = vmatprep.subr.mxu0 0.0
    %680 = vmatpush2.msra.mxu0 0.0
    %681 = vmatprep.subr.mxu0 0.0
    %682 = vmatpush2.msra.mxu0 0.0
    %683 = vmatprep.subr.mxu0 0.0
    %684 = vmatpush2.msra.mxu0 0.0
    %685 = vmatprep.subr.mxu0 0.0
    %686 = vmatpush2.msra.mxu0 0.0
    %687 = vmatprep.subr.mxu0 0.0
    %688 = vmatpush2.msra.mxu0 0.0
    %689 = vmatprep.subr.mxu0 0.0
    %690 = vmatpush2.msra.mxu0 0.0
    %691 = vmatprep.subr.mxu0 0.0
    %692 = vmatpush2.msra.mxu0 0.0
    %693 = vmatprep.subr.mxu0 0.0
    %694 = vmatpush2.msra.mxu0 0.0
    %695 = vmatprep.mubr.f32.mxu0 0.0
    %696 = vmatmul.mubr.f32.gmra.mxu0 %v274
    %v697 = vpop.f32.mrf.mxu0
    %v698 = vadd.f32 %v95, %v697
    %v699 = vpop.f32.mrf.mxu0
    %700 = vdwg.mxu0
    %v701 = vadd.f32 %v698, %v510
    %v702 = vsel %vm123, %v701, 0.0
    %703 = vadd.xlane.f32.xlu0 %v702
    %v704 = vpop.xlane.xlu0 %703
    %v705 = vmul.f32 %v704, %v127
    %v706 = vsub.f32 %v701, %v705
    %v707 = vmul.f32 %v706, %v706
    %v708 = vsel %vm123, %v707, 0.0
    %709 = vadd.xlane.f32.xlu0 %v708
    %v710 = vpop.xlane.xlu0 %709
    %v711 = vmul.f32 %v710, %v127
    %v712 = vadd.f32 %v711, 1e-05
    %v713 = vrsqrt.pop %v712
    %v714 = vmul.f32 %v706, %v713
    %v715 = vmul.f32 %v714, %v51
    %v716 = vadd.f32 %v715, %v56
    %v718 = vsel %vm123, %v716, 0
    %720 = vmatprep.subr.mxu0 0.0
    %721 = vmatpush1.msra.mxu0 0.0
    %722 = vmatprep.subr.mxu0 0.0
    %723 = vmatpush1.msra.mxu0 0.0
    %724 = vmatprep.subr.mxu0 0.0
    %725 = vmatpush1.msra.mxu0 0.0
    %726 = vmatprep.subr.mxu0 0.0
    %727 = vmatpush1.msra.mxu0 0.0
    %728 = vmatprep.subr.mxu0 0.0
    %729 = vmatpush1.msra.mxu0 0.0
    %730 = vmatprep.subr.mxu0 0.0
    %731 = vmatpush1.msra.mxu0 0.0
    %732 = vmatprep.subr.mxu0 0.0
    %733 = vmatpush1.msra.mxu0 0.0
    %734 = vmatprep.subr.mxu0 0.0
    %735 = vmatpush1.msra.mxu0 0.0
    %736 = vmatprep.subr.mxu0 0.0
    %737 = vmatpush1.msra.mxu0 0.0
    %738 = vmatprep.subr.mxu0 0.0
    %739 = vmatpush1.msra.mxu0 0.0
    %740 = vmatprep.subr.mxu0 0.0
    %741 = vmatpush1.msra.mxu0 0.0
    %742 = vmatprep.subr.mxu0 0.0
    %743 = vmatpush1.msra.mxu0 0.0
    %744 = vmatprep.subr.mxu0 0.0
    %745 = vmatpush1.msra.mxu0 %v105
    %746 = vmatprep.subr.mxu0 0.0
    %747 = vmatpush1.msra.mxu0 %v104
    %748 = vmatprep.subr.mxu0 0.0
    %749 = vmatpush1.msra.mxu0 %v103
    %750 = vmatprep.subr.mxu0 0.0
    %751 = vmatpush1.msra.mxu0 %v102
    %752 = vmatprep.subr.mxu0 0.0
    %753 = vmatpush2.msra.mxu0 0.0
    %754 = vmatprep.subr.mxu0 0.0
    %755 = vmatpush2.msra.mxu0 0.0
    %756 = vmatprep.subr.mxu0 0.0
    %757 = vmatpush2.msra.mxu0 0.0
    %758 = vmatprep.subr.mxu0 0.0
    %759 = vmatpush2.msra.mxu0 0.0
    %760 = vmatprep.subr.mxu0 0.0
    %761 = vmatpush2.msra.mxu0 0.0
    %762 = vmatprep.subr.mxu0 0.0
    %763 = vmatpush2.msra.mxu0 0.0
    %764 = vmatprep.subr.mxu0 0.0
    %765 = vmatpush2.msra.mxu0 0.0
    %766 = vmatprep.subr.mxu0 0.0
    %767 = vmatpush2.msra.mxu0 0.0
    %768 = vmatprep.subr.mxu0 0.0
    %769 = vmatpush2.msra.mxu0 0.0
    %770 = vmatprep.subr.mxu0 0.0
    %771 = vmatpush2.msra.mxu0 0.0
    %772 = vmatprep.subr.mxu0 0.0
    %773 = vmatpush2.msra.mxu0 0.0
    %774 = vmatprep.subr.mxu0 0.0
    %775 = vmatpush2.msra.mxu0 0.0
    %776 = vmatprep.subr.mxu0 0.0
    %777 = vmatpush2.msra.mxu0 0.0
    %778 = vmatprep.subr.mxu0 0.0
    %779 = vmatpush2.msra.mxu0 0.0
    %780 = vmatprep.subr.mxu0 0.0
    %781 = vmatpush2.msra.mxu0 0.0
    %782 = vmatprep.subr.mxu0 0.0
    %783 = vmatpush2.msra.mxu0 0.0
    %784 = vmatprep.mubr.f32.mxu0 0.0
    %785 = vmatmul.mubr.f32.gmra.mxu0 %v718
    %v786 = vpop.f32.mrf.mxu0
    %v787 = vadd.f32 %v66, %v786
    %v788 = vpop.f32.mrf.mxu0
    %789 = vdwg.mxu0
    %v790 = vmul.f32 %v787, 0.5
    %v791 = vmul.f32 %v787, 0.70710677
    %v792 = verf.f32.pop %v791
    %v793 = vadd.f32 %v792, 1.0
    %v794 = vmul.f32 %v790, %v793
    %795 = vmatprep.subr.mxu0 0.0
    %796 = vmatpush1.msra.mxu0 %v121
    %797 = vmatprep.subr.mxu0 0.0
    %798 = vmatpush1.msra.mxu0 %v120
    %799 = vmatprep.subr.mxu0 0.0
    %800 = vmatpush1.msra.mxu0 %v119
    %801 = vmatprep.subr.mxu0 0.0
    %802 = vmatpush1.msra.mxu0 %v118
    %803 = vmatprep.subr.mxu0 0.0
    %804 = vmatpush1.msra.mxu0 %v117
    %805 = vmatprep.subr.mxu0 0.0
    %806 = vmatpush1.msra.mxu0 %v116
    %807 = vmatprep.subr.mxu0 0.0
    %808 = vmatpush1.msra.mxu0 %v115
    %809 = vmatprep.subr.mxu0 0.0
    %810 = vmatpush1.msra.mxu0 %v114
    %811 = vmatprep.subr.mxu0 0.0
    %812 = vmatpush1.msra.mxu0 %v113
    %813 = vmatprep.subr.mxu0 0.0
    %814 = vmatpush1.msra.mxu0 %v112
    %815 = vmatprep.subr.mxu0 0.0
    %816 = vmatpush1.msra.mxu0 %v111
    %817 = vmatprep.subr.mxu0 0.0
    %818 = vmatpush1.msra.mxu0 %v110
    %819 = vmatprep.subr.mxu0 0.0
    %820 = vmatpush1.msra.mxu0 %v109
    %821 = vmatprep.subr.mxu0 0.0
    %822 = vmatpush1.msra.mxu0 %v108
    %823 = vmatprep.subr.mxu0 0.0
    %824 = vmatpush1.msra.mxu0 %v107
    %825 = vmatprep.subr.mxu0 0.0
    %826 = vmatpush1.msra.mxu0 %v106
    %827 = vmatprep.subr.mxu0 0.0
    %828 = vmatpush2.msra.mxu0 0.0
    %829 = vmatprep.subr.mxu0 0.0
    %830 = vmatpush2.msra.mxu0 0.0
    %831 = vmatprep.subr.mxu0 0.0
    %832 = vmatpush2.msra.mxu0 0.0
    %833 = vmatprep.subr.mxu0 0.0
    %834 = vmatpush2.msra.mxu0 0.0
    %835 = vmatprep.subr.mxu0 0.0
    %836 = vmatpush2.msra.mxu0 0.0
    %837 = vmatprep.subr.mxu0 0.0
    %838 = vmatpush2.msra.mxu0 0.0
    %839 = vmatprep.subr.mxu0 0.0
    %840 = vmatpush2.msra.mxu0 0.0
    %841 = vmatprep.subr.mxu0 0.0
    %842 = vmatpush2.msra.mxu0 0.0
    %843 = vmatprep.subr.mxu0 0.0
    %844 = vmatpush2.msra.mxu0 0.0
    %845 = vmatprep.subr.mxu0 0.0
    %846 = vmatpush2.msra.mxu0 0.0
    %847 = vmatprep.subr.mxu0 0.0
    %848 = vmatpush2.msra.mxu0 0.0
    %849 = vmatprep.subr.mxu0 0.0
    %850 = vmatpush2.msra.mxu0 0.0
    %851 = vmatprep.subr.mxu0 0.0
    %852 = vmatpush2.msra.mxu0 0.0
    %853 = vmatprep.subr.mxu0 0.0
    %854 = vmatpush2.msra.mxu0 0.0
    %855 = vmatprep.subr.mxu0 0.0
    %856 = vmatpush2.msra.mxu0 0.0
    %857 = vmatprep.subr.mxu0 0.0
    %858 = vmatpush2.msra.mxu0 0.0
    %859 = vmatprep.mubr.f32.mxu0 0.0
    %860 = vmatmul.mubr.f32.gmra.mxu0 %v794
    %v861 = vpop.f32.mrf.mxu0
    %v862 = vadd.f32 %v61, %v861
    %v863 = vpop.f32.mrf.mxu0
    %864 = vdwg.mxu0
    %v865 = vadd.f32 %v862, %v701
    %v866 = vsel %vm123, %v865, 0.0
    %867 = vadd.xlane.f32.xlu0 %v866
    %v868 = vpop.xlane.xlu0 %867
    %v869 = vmul.f32 %v868, %v127
    %v870 = vsub.f32 %v865, %v869
    %v871 = vmul.f32 %v870, %v870
    %v872 = vsel %vm123, %v871, 0.0
    %873 = vadd.xlane.f32.xlu0 %v872
    %v874 = vpop.xlane.xlu0 %873
    %v875 = vmul.f32 %v874, %v127
    %v876 = vadd.f32 %v875, 1e-05
    %v877 = vrsqrt.pop %v876
    %v878 = vmul.f32 %v870, %v877
    %v879 = vmul.f32 %v878, %v31
    %v880 = vadd.f32 %v879, %v36
    %881 = vst.msk [vmem:[#allocation2] sm:$0xff] %vm123, %v880
    %s882 = scalar_lea.vmem %s0, 8
    %v883 = vld [vmem:[%s882] sm:$0xff]
    %v884 = vsel %vm123, %v883, 0.0
    %885 = vadd.xlane.f32.xlu0 %v884
    %v886 = vpop.xlane.xlu0 %885
    %v887 = vmul.f32 %v886, %v127
    %v888 = vsub.f32 %v883, %v887
    %v889 = vmul.f32 %v888, %v888
    %v890 = vsel %vm123, %v889, 0.0
    %891 = vadd.xlane.f32.xlu0 %v890
    %v892 = vpop.xlane.xlu0 %891
    %v893 = vmul.f32 %v892, %v127
    %v894 = vadd.f32 %v893, 1e-05
    %v895 = vrsqrt.pop %v894
    %v896 = vmul.f32 %v888, %v895
    %v897 = vmul.f32 %v896, %v31
    %v898 = vadd.f32 %v897, %v36
    %v899 = vsel %vm123, %v898, 0.0
    %900 = vadd.xlane.f32.xlu0 %v899
    %v901 = vpop.xlane.xlu0 %900
    %v902 = vmul.f32 %v901, %v127
    %v903 = vsub.f32 %v898, %v902
    %v904 = vmul.f32 %v903, %v903
    %v905 = vsel %vm123, %v904, 0.0
    %906 = vadd.xlane.f32.xlu0 %v905
    %v907 = vpop.xlane.xlu0 %906
    %v908 = vmul.f32 %v907, %v127
    %v909 = vadd.f32 %v908, 1e-05
    %v910 = vrsqrt.pop %v909
    %v911 = vmul.f32 %v903, %v910
    %v912 = vmul.f32 %v911, %v41
    %v913 = vadd.f32 %v912, %v46
    %914 = vmatprep.subr.mxu0 0.0
    %915 = vmatpush1.msra.mxu0 0.0
    %916 = vmatprep.subr.mxu0 0.0
    %917 = vmatpush1.msra.mxu0 0.0
    %918 = vmatprep.subr.mxu0 0.0
    %919 = vmatpush1.msra.mxu0 0.0
    %920 = vmatprep.subr.mxu0 0.0
    %921 = vmatpush1.msra.mxu0 0.0
    %922 = vmatprep.subr.mxu0 0.0
    %923 = vmatpush1.msra.mxu0 0.0
    %924 = vmatprep.subr.mxu0 0.0
    %925 = vmatpush1.msra.mxu0 0.0
    %926 = vmatprep.subr.mxu0 0.0
    %927 = vmatpush1.msra.mxu0 0.0
    %928 = vmatprep.subr.mxu0 0.0
    %929 = vmatpush1.msra.mxu0 0.0
    %930 = vmatprep.subr.mxu0 0.0
    %931 = vmatpush1.msra.mxu0 0.0
    %932 = vmatprep.subr.mxu0 0.0
    %933 = vmatpush1.msra.mxu0 0.0
    %934 = vmatprep.subr.mxu0 0.0
    %935 = vmatpush1.msra.mxu0 0.0
    %936 = vmatprep.subr.mxu0 0.0
    %937 = vmatpush1.msra.mxu0 0.0
    %938 = vmatprep.subr.mxu0 0.0
    %939 = vmatpush1.msra.mxu0 0.0
    %940 = vmatprep.subr.mxu0 0.0
    %941 = vmatpush1.msra.mxu0 0.0
    %942 = vmatprep.subr.mxu0 0.0
    %943 = vmatpush1.msra.mxu0 0.0
    %944 = vmatprep.subr.mxu0 0.0
    %945 = vmatpush1.msra.mxu0 %v913
    %946 = vmatprep.subr.mxu0 0.0
    %947 = vmatpush2.msra.mxu0 0.0
    %948 = vmatprep.subr.mxu0 0.0
    %949 = vmatpush2.msra.mxu0 0.0
    %950 = vmatprep.subr.mxu0 0.0
    %951 = vmatpush2.msra.mxu0 0.0
    %952 = vmatprep.subr.mxu0 0.0
    %953 = vmatpush2.msra.mxu0 0.0
    %954 = vmatprep.subr.mxu0 0.0
    %955 = vmatpush2.msra.mxu0 0.0
    %956 = vmatprep.subr.mxu0 0.0
    %957 = vmatpush2.msra.mxu0 0.0
    %958 = vmatprep.subr.mxu0 0.0
    %959 = vmatpush2.msra.mxu0 0.0
    %960 = vmatprep.subr.mxu0 0.0
    %961 = vmatpush2.msra.mxu0 0.0
    %962 = vmatprep.subr.mxu0 0.0
    %963 = vmatpush2.msra.mxu0 0.0
    %964 = vmatprep.subr.mxu0 0.0
    %965 = vmatpush2.msra.mxu0 0.0
    %966 = vmatprep.subr.mxu0 0.0
    %967 = vmatpush2.msra.mxu0 0.0
    %968 = vmatprep.subr.mxu0 0.0
    %969 = vmatpush2.msra.mxu0 0.0
    %970 = vmatprep.subr.mxu0 0.0
    %971 = vmatpush2.msra.mxu0 0.0
    %972 = vmatprep.subr.mxu0 0.0
    %973 = vmatpush2.msra.mxu0 0.0
    %974 = vmatprep.subr.mxu0 0.0
    %975 = vmatpush2.msra.mxu0 0.0
    %976 = vmatprep.subr.mxu0 0.0
    %977 = vmatpush2.msra.mxu0 0.0
    %978 = vmatprep.mubr.f32.mxu0 0.0
    %979 = vmatmul.mubr.f32.gmra.mxu0 %v157
    %v980 = vpop.f32.mrf.mxu0
    %v981 = vadd.f32 %v74, %v980
    %v982 = vpop.f32.mrf.mxu0
    %983 = vmatprep.mubr.f32.mxu0 0.0
    %984 = vmatmul.mubr.f32.gmra.mxu0 %v160
    %v985 = vpop.f32.mrf.mxu0
    %v986 = vadd.f32 %v79, %v985
    %v987 = vpop.f32.mrf.mxu0
    %988 = vmatprep.mubr.f32.mxu0 0.0
    %989 = vmatmul.mubr.f32.gmra.mxu0 %v163
    %v990 = vpop.f32.mrf.mxu0
    %v991 = vadd.f32 %v84, %v990
    %v992 = vpop.f32.mrf.mxu0
    %993 = vmatprep.mubr.f32.mxu0 0.0
    %994 = vmatmul.mubr.f32.gmra.mxu0 %v166
    %v995 = vpop.f32.mrf.mxu0
    %v996 = vadd.f32 %v89, %v995
    %v997 = vpop.f32.mrf.mxu0
    %998 = vdwg.mxu0
    %v999 = vmul.f32 %v981, 0.5
    %v1000 = vmul.f32 %v986, 0.5
    %v1001 = vmul.f32 %v991, 0.5
    %v1002 = vmul.f32 %v996, 0.5
    %v1003 = vmul.f32 %v981, 0.70710677
    %v1004 = vmul.f32 %v986, 0.70710677
    %v1005 = vmul.f32 %v991, 0.70710677
    %v1006 = vmul.f32 %v996, 0.70710677
    %v1007 = verf.f32.pop %v1003
    %v1008 = verf.f32.pop %v1004
    %v1009 = verf.f32.pop %v1005
    %v1010 = verf.f32.pop %v1006
    %v1011 = vadd.f32 %v1007, 1.0
    %v1012 = vadd.f32 %v1008, 1.0
    %v1013 = vadd.f32 %v1009, 1.0
    %v1014 = vadd.f32 %v1010, 1.0
    %v1015 = vmul.f32 %v999, %v1011
    %v1016 = vmul.f32 %v1000, %v1012
    %v1017 = vmul.f32 %v1001, %v1013
    %v1018 = vmul.f32 %v1002, %v1014
    %1019 = vmatprep.subr.mxu0 0.0
    %1020 = vmatpush1.msra.mxu0 0.0
    %1021 = vmatprep.subr.mxu0 0.0
    %1022 = vmatpush1.msra.mxu0 0.0
    %1023 = vmatprep.subr.mxu0 0.0
    %1024 = vmatpush1.msra.mxu0 0.0
    %1025 = vmatprep.subr.mxu0 0.0
    %1026 = vmatpush1.msra.mxu0 0.0
    %1027 = vmatprep.subr.mxu0 0.0
    %1028 = vmatpush1.msra.mxu0 0.0
    %1029 = vmatprep.subr.mxu0 0.0
    %1030 = vmatpush1.msra.mxu0 0.0
    %1031 = vmatprep.subr.mxu0 0.0
    %1032 = vmatpush1.msra.mxu0 0.0
    %1033 = vmatprep.subr.mxu0 0.0
    %1034 = vmatpush1.msra.mxu0 0.0
    %1035 = vmatprep.subr.mxu0 0.0
    %1036 = vmatpush1.msra.mxu0 0.0
    %1037 = vmatprep.subr.mxu0 0.0
    %1038 = vmatpush1.msra.mxu0 0.0
    %1039 = vmatprep.subr.mxu0 0.0
    %1040 = vmatpush1.msra.mxu0 0.0
    %1041 = vmatprep.subr.mxu0 0.0
    %1042 = vmatpush1.msra.mxu0 0.0
    %1043 = vmatprep.subr.mxu0 0.0
    %1044 = vmatpush1.msra.mxu0 %v1018
    %1045 = vmatprep.subr.mxu0 0.0
    %1046 = vmatpush1.msra.mxu0 %v1017
    %1047 = vmatprep.subr.mxu0 0.0
    %1048 = vmatpush1.msra.mxu0 %v1016
    %1049 = vmatprep.subr.mxu0 0.0
    %1050 = vmatpush1.msra.mxu0 %v1015
    %1051 = vmatprep.subr.mxu0 0.0
    %1052 = vmatpush2.msra.mxu0 0.0
    %1053 = vmatprep.subr.mxu0 0.0
    %1054 = vmatpush2.msra.mxu0 0.0
    %1055 = vmatprep.subr.mxu0 0.0
    %1056 = vmatpush2.msra.mxu0 0.0
    %1057 = vmatprep.subr.mxu0 0.0
    %1058 = vmatpush2.msra.mxu0 0.0
    %1059 = vmatprep.subr.mxu0 0.0
    %1060 = vmatpush2.msra.mxu0 0.0
    %1061 = vmatprep.subr.mxu0 0.0
    %1062 = vmatpush2.msra.mxu0 0.0
    %1063 = vmatprep.subr.mxu0 0.0
    %1064 = vmatpush2.msra.mxu0 0.0
    %1065 = vmatprep.subr.mxu0 0.0
    %1066 = vmatpush2.msra.mxu0 0.0
    %1067 = vmatprep.subr.mxu0 0.0
    %1068 = vmatpush2.msra.mxu0 0.0
    %1069 = vmatprep.subr.mxu0 0.0
    %1070 = vmatpush2.msra.mxu0 0.0
    %1071 = vmatprep.subr.mxu0 0.0
    %1072 = vmatpush2.msra.mxu0 0.0
    %1073 = vmatprep.subr.mxu0 0.0
    %1074 = vmatpush2.msra.mxu0 0.0
    %1075 = vmatprep.subr.mxu0 0.0
    %1076 = vmatpush2.msra.mxu0 0.0
    %1077 = vmatprep.subr.mxu0 0.0
    %1078 = vmatpush2.msra.mxu0 0.0
    %1079 = vmatprep.subr.mxu0 0.0
    %1080 = vmatpush2.msra.mxu0 0.0
    %1081 = vmatprep.subr.mxu0 0.0
    %1082 = vmatpush2.msra.mxu0 0.0
    %1083 = vmatprep.mubr.f32.mxu0 0.0
    %1084 = vmatmul.mubr.f32.gmra.mxu0 %v274
    %v1085 = vpop.f32.mrf.mxu0
    %v1086 = vadd.f32 %v95, %v1085
    %v1087 = vpop.f32.mrf.mxu0
    %1088 = vdwg.mxu0
    %v1089 = vadd.f32 %v1086, %v898
    %v1090 = vsel %vm123, %v1089, 0.0
    %1091 = vadd.xlane.f32.xlu0 %v1090
    %v1092 = vpop.xlane.xlu0 %1091
    %v1093 = vmul.f32 %v1092, %v127
    %v1094 = vsub.f32 %v1089, %v1093
    %v1095 = vmul.f32 %v1094, %v1094
    %v1096 = vsel %vm123, %v1095, 0.0
    %1097 = vadd.xlane.f32.xlu0 %v1096
    %v1098 = vpop.xlane.xlu0 %1097
    %v1099 = vmul.f32 %v1098, %v127
    %v1100 = vadd.f32 %v1099, 1e-05
    %v1101 = vrsqrt.pop %v1100
    %v1102 = vmul.f32 %v1094, %v1101
    %v1103 = vmul.f32 %v1102, %v51
    %v1104 = vadd.f32 %v1103, %v56
    %v1106 = vsel %vm123, %v1104, 0
    %1108 = vmatprep.subr.mxu0 0.0
    %1109 = vmatpush1.msra.mxu0 0.0
    %1110 = vmatprep.subr.mxu0 0.0
    %1111 = vmatpush1.msra.mxu0 0.0
    %1112 = vmatprep.subr.mxu0 0.0
    %1113 = vmatpush1.msra.mxu0 0.0
    %1114 = vmatprep.subr.mxu0 0.0
    %1115 = vmatpush1.msra.mxu0 0.0
    %1116 = vmatprep.subr.mxu0 0.0
    %1117 = vmatpush1.msra.mxu0 0.0
    %1118 = vmatprep.subr.mxu0 0.0
    %1119 = vmatpush1.msra.mxu0 0.0
    %1120 = vmatprep.subr.mxu0 0.0
    %1121 = vmatpush1.msra.mxu0 0.0
    %1122 = vmatprep.subr.mxu0 0.0
    %1123 = vmatpush1.msra.mxu0 0.0
    %1124 = vmatprep.subr.mxu0 0.0
    %1125 = vmatpush1.msra.mxu0 0.0
    %1126 = vmatprep.subr.mxu0 0.0
    %1127 = vmatpush1.msra.mxu0 0.0
    %1128 = vmatprep.subr.mxu0 0.0
    %1129 = vmatpush1.msra.mxu0 0.0
    %1130 = vmatprep.subr.mxu0 0.0
    %1131 = vmatpush1.msra.mxu0 0.0
    %1132 = vmatprep.subr.mxu0 0.0
    %1133 = vmatpush1.msra.mxu0 %v105
    %1134 = vmatprep.subr.mxu0 0.0
    %1135 = vmatpush1.msra.mxu0 %v104
    %1136 = vmatprep.subr.mxu0 0.0
    %1137 = vmatpush1.msra.mxu0 %v103
    %1138 = vmatprep.subr.mxu0 0.0
    %1139 = vmatpush1.msra.mxu0 %v102
    %1140 = vmatprep.subr.mxu0 0.0
    %1141 = vmatpush2.msra.mxu0 0.0
    %1142 = vmatprep.subr.mxu0 0.0
    %1143 = vmatpush2.msra.mxu0 0.0
    %1144 = vmatprep.subr.mxu0 0.0
    %1145 = vmatpush2.msra.mxu0 0.0
    %1146 = vmatprep.subr.mxu0 0.0
    %1147 = vmatpush2.msra.mxu0 0.0
    %1148 = vmatprep.subr.mxu0 0.0
    %1149 = vmatpush2.msra.mxu0 0.0
    %1150 = vmatprep.subr.mxu0 0.0
    %1151 = vmatpush2.msra.mxu0 0.0
    %1152 = vmatprep.subr.mxu0 0.0
    %1153 = vmatpush2.msra.mxu0 0.0
    %1154 = vmatprep.subr.mxu0 0.0
    %1155 = vmatpush2.msra.mxu0 0.0
    %1156 = vmatprep.subr.mxu0 0.0
    %1157 = vmatpush2.msra.mxu0 0.0
    %1158 = vmatprep.subr.mxu0 0.0
    %1159 = vmatpush2.msra.mxu0 0.0
    %1160 = vmatprep.subr.mxu0 0.0
    %1161 = vmatpush2.msra.mxu0 0.0
    %1162 = vmatprep.subr.mxu0 0.0
    %1163 = vmatpush2.msra.mxu0 0.0
    %1164 = vmatprep.subr.mxu0 0.0
    %1165 = vmatpush2.msra.mxu0 0.0
    %1166 = vmatprep.subr.mxu0 0.0
    %1167 = vmatpush2.msra.mxu0 0.0
    %1168 = vmatprep.subr.mxu0 0.0
    %1169 = vmatpush2.msra.mxu0 0.0
    %1170 = vmatprep.subr.mxu0 0.0
    %1171 = vmatpush2.msra.mxu0 0.0
    %1172 = vmatprep.mubr.f32.mxu0 0.0
    %1173 = vmatmul.mubr.f32.gmra.mxu0 %v1106
    %v1174 = vpop.f32.mrf.mxu0
    %v1175 = vadd.f32 %v66, %v1174
    %v1176 = vpop.f32.mrf.mxu0
    %1177 = vdwg.mxu0
    %v1178 = vmul.f32 %v1175, 0.5
    %v1179 = vmul.f32 %v1175, 0.70710677
    %v1180 = verf.f32.pop %v1179
    %v1181 = vadd.f32 %v1180, 1.0
    %v1182 = vmul.f32 %v1178, %v1181
    %1183 = vmatprep.subr.mxu0 0.0
    %1184 = vmatpush1.msra.mxu0 %v121
    %1185 = vmatprep.subr.mxu0 0.0
    %1186 = vmatpush1.msra.mxu0 %v120
    %1187 = vmatprep.subr.mxu0 0.0
    %1188 = vmatpush1.msra.mxu0 %v119
    %1189 = vmatprep.subr.mxu0 0.0
    %1190 = vmatpush1.msra.mxu0 %v118
    %1191 = vmatprep.subr.mxu0 0.0
    %1192 = vmatpush1.msra.mxu0 %v117
    %1193 = vmatprep.subr.mxu0 0.0
    %1194 = vmatpush1.msra.mxu0 %v116
    %1195 = vmatprep.subr.mxu0 0.0
    %1196 = vmatpush1.msra.mxu0 %v115
    %1197 = vmatprep.subr.mxu0 0.0
    %1198 = vmatpush1.msra.mxu0 %v114
    %1199 = vmatprep.subr.mxu0 0.0
    %1200 = vmatpush1.msra.mxu0 %v113
    %1201 = vmatprep.subr.mxu0 0.0
    %1202 = vmatpush1.msra.mxu0 %v112
    %1203 = vmatprep.subr.mxu0 0.0
    %1204 = vmatpush1.msra.mxu0 %v111
    %1205 = vmatprep.subr.mxu0 0.0
    %1206 = vmatpush1.msra.mxu0 %v110
    %1207 = vmatprep.subr.mxu0 0.0
    %1208 = vmatpush1.msra.mxu0 %v109
    %1209 = vmatprep.subr.mxu0 0.0
    %1210 = vmatpush1.msra.mxu0 %v108
    %1211 = vmatprep.subr.mxu0 0.0
    %1212 = vmatpush1.msra.mxu0 %v107
    %1213 = vmatprep.subr.mxu0 0.0
    %1214 = vmatpush1.msra.mxu0 %v106
    %1215 = vmatprep.subr.mxu0 0.0
    %1216 = vmatpush2.msra.mxu0 0.0
    %1217 = vmatprep.subr.mxu0 0.0
    %1218 = vmatpush2.msra.mxu0 0.0
    %1219 = vmatprep.subr.mxu0 0.0
    %1220 = vmatpush2.msra.mxu0 0.0
    %1221 = vmatprep.subr.mxu0 0.0
    %1222 = vmatpush2.msra.mxu0 0.0
    %1223 = vmatprep.subr.mxu0 0.0
    %1224 = vmatpush2.msra.mxu0 0.0
    %1225 = vmatprep.subr.mxu0 0.0
    %1226 = vmatpush2.msra.mxu0 0.0
    %1227 = vmatprep.subr.mxu0 0.0
    %1228 = vmatpush2.msra.mxu0 0.0
    %1229 = vmatprep.subr.mxu0 0.0
    %1230 = vmatpush2.msra.mxu0 0.0
    %1231 = vmatprep.subr.mxu0 0.0
    %1232 = vmatpush2.msra.mxu0 0.0
    %1233 = vmatprep.subr.mxu0 0.0
    %1234 = vmatpush2.msra.mxu0 0.0
    %1235 = vmatprep.subr.mxu0 0.0
    %1236 = vmatpush2.msra.mxu0 0.0
    %1237 = vmatprep.subr.mxu0 0.0
    %1238 = vmatpush2.msra.mxu0 0.0
    %1239 = vmatprep.subr.mxu0 0.0
    %1240 = vmatpush2.msra.mxu0 0.0
    %1241 = vmatprep.subr.mxu0 0.0
    %1242 = vmatpush2.msra.mxu0 0.0
    %1243 = vmatprep.subr.mxu0 0.0
    %1244 = vmatpush2.msra.mxu0 0.0
    %1245 = vmatprep.subr.mxu0 0.0
    %1246 = vmatpush2.msra.mxu0 0.0
    %1247 = vmatprep.mubr.f32.mxu0 0.0
    %1248 = vmatmul.mubr.f32.gmra.mxu0 %v1182
    %v1249 = vpop.f32.mrf.mxu0
    %v1250 = vadd.f32 %v61, %v1249
    %v1251 = vpop.f32.mrf.mxu0
    %1252 = vdwg.mxu0
    %v1253 = vadd.f32 %v1250, %v1089
    %v1254 = vsel %vm123, %v1253, 0.0
    %1255 = vadd.xlane.f32.xlu0 %v1254
    %v1256 = vpop.xlane.xlu0 %1255
    %v1257 = vmul.f32 %v1256, %v127
    %v1258 = vsub.f32 %v1253, %v1257
    %v1259 = vmul.f32 %v1258, %v1258
    %v1260 = vsel %vm123, %v1259, 0.0
    %1261 = vadd.xlane.f32.xlu0 %v1260
    %v1262 = vpop.xlane.xlu0 %1261
    %v1263 = vmul.f32 %v1262, %v127
    %v1264 = vadd.f32 %v1263, 1e-05
    %v1265 = vrsqrt.pop %v1264
    %v1266 = vmul.f32 %v1258, %v1265
    %v1267 = vmul.f32 %v1266, %v41
    %v1268 = vadd.f32 %v1267, %v46
    %1269 = vmatprep.subr.mxu0 0.0
    %1270 = vmatpush1.msra.mxu0 0.0
    %1271 = vmatprep.subr.mxu0 0.0
    %1272 = vmatpush1.msra.mxu0 0.0
    %1273 = vmatprep.subr.mxu0 0.0
    %1274 = vmatpush1.msra.mxu0 0.0
    %1275 = vmatprep.subr.mxu0 0.0
    %1276 = vmatpush1.msra.mxu0 0.0
    %1277 = vmatprep.subr.mxu0 0.0
    %1278 = vmatpush1.msra.mxu0 0.0
    %1279 = vmatprep.subr.mxu0 0.0
    %1280 = vmatpush1.msra.mxu0 0.0
    %1281 = vmatprep.subr.mxu0 0.0
    %1282 = vmatpush1.msra.mxu0 0.0
    %1283 = vmatprep.subr.mxu0 0.0
    %1284 = vmatpush1.msra.mxu0 0.0
    %1285 = vmatprep.subr.mxu0 0.0
    %1286 = vmatpush1.msra.mxu0 0.0
    %1287 = vmatprep.subr.mxu0 0.0
    %1288 = vmatpush1.msra.mxu0 0.0
    %1289 = vmatprep.subr.mxu0 0.0
    %1290 = vmatpush1.msra.mxu0 0.0
    %1291 = vmatprep.subr.mxu0 0.0
    %1292 = vmatpush1.msra.mxu0 0.0
    %1293 = vmatprep.subr.mxu0 0.0
    %1294 = vmatpush1.msra.mxu0 0.0
    %1295 = vmatprep.subr.mxu0 0.0
    %1296 = vmatpush1.msra.mxu0 0.0
    %1297 = vmatprep.subr.mxu0 0.0
    %1298 = vmatpush1.msra.mxu0 0.0
    %1299 = vmatprep.subr.mxu0 0.0
    %1300 = vmatpush1.msra.mxu0 %v1268
    %1301 = vmatprep.subr.mxu0 0.0
    %1302 = vmatpush2.msra.mxu0 0.0
    %1303 = vmatprep.subr.mxu0 0.0
    %1304 = vmatpush2.msra.mxu0 0.0
    %1305 = vmatprep.subr.mxu0 0.0
    %1306 = vmatpush2.msra.mxu0 0.0
    %1307 = vmatprep.subr.mxu0 0.0
    %1308 = vmatpush2.msra.mxu0 0.0
    %1309 = vmatprep.subr.mxu0 0.0
    %1310 = vmatpush2.msra.mxu0 0.0
    %1311 = vmatprep.subr.mxu0 0.0
    %1312 = vmatpush2.msra.mxu0 0.0
    %1313 = vmatprep.subr.mxu0 0.0
    %1314 = vmatpush2.msra.mxu0 0.0
    %1315 = vmatprep.subr.mxu0 0.0
    %1316 = vmatpush2.msra.mxu0 0.0
    %1317 = vmatprep.subr.mxu0 0.0
    %1318 = vmatpush2.msra.mxu0 0.0
    %1319 = vmatprep.subr.mxu0 0.0
    %1320 = vmatpush2.msra.mxu0 0.0
    %1321 = vmatprep.subr.mxu0 0.0
    %1322 = vmatpush2.msra.mxu0 0.0
    %1323 = vmatprep.subr.mxu0 0.0
    %1324 = vmatpush2.msra.mxu0 0.0
    %1325 = vmatprep.subr.mxu0 0.0
    %1326 = vmatpush2.msra.mxu0 0.0
    %1327 = vmatprep.subr.mxu0 0.0
    %1328 = vmatpush2.msra.mxu0 0.0
    %1329 = vmatprep.subr.mxu0 0.0
    %1330 = vmatpush2.msra.mxu0 0.0
    %1331 = vmatprep.subr.mxu0 0.0
    %1332 = vmatpush2.msra.mxu0 0.0
    %1333 = vmatprep.mubr.f32.mxu0 0.0
    %1334 = vmatmul.mubr.f32.gmra.mxu0 %v157
    %v1335 = vpop.f32.mrf.mxu0
    %v1336 = vadd.f32 %v74, %v1335
    %v1337 = vpop.f32.mrf.mxu0
    %1338 = vmatprep.mubr.f32.mxu0 0.0
    %1339 = vmatmul.mubr.f32.gmra.mxu0 %v160
    %v1340 = vpop.f32.mrf.mxu0
    %v1341 = vadd.f32 %v79, %v1340
    %v1342 = vpop.f32.mrf.mxu0
    %1343 = vmatprep.mubr.f32.mxu0 0.0
    %1344 = vmatmul.mubr.f32.gmra.mxu0 %v163
    %v1345 = vpop.f32.mrf.mxu0
    %v1346 = vadd.f32 %v84, %v1345
    %v1347 = vpop.f32.mrf.mxu0
    %1348 = vmatprep.mubr.f32.mxu0 0.0
    %1349 = vmatmul.mubr.f32.gmra.mxu0 %v166
    %v1350 = vpop.f32.mrf.mxu0
    %v1351 = vadd.f32 %v89, %v1350
    %v1352 = vpop.f32.mrf.mxu0
    %1353 = vdwg.mxu0
    %v1354 = vmul.f32 %v1336, 0.5
    %v1355 = vmul.f32 %v1341, 0.5
    %v1356 = vmul.f32 %v1346, 0.5
    %v1357 = vmul.f32 %v1351, 0.5
    %v1358 = vmul.f32 %v1336, 0.70710677
    %v1359 = vmul.f32 %v1341, 0.70710677
    %v1360 = vmul.f32 %v1346, 0.70710677
    %v1361 = vmul.f32 %v1351, 0.70710677
    %v1362 = verf.f32.pop %v1358
    %v1363 = verf.f32.pop %v1359
    %v1364 = verf.f32.pop %v1360
    %v1365 = verf.f32.pop %v1361
    %v1366 = vadd.f32 %v1362, 1.0
    %v1367 = vadd.f32 %v1363, 1.0
    %v1368 = vadd.f32 %v1364, 1.0
    %v1369 = vadd.f32 %v1365, 1.0
    %v1370 = vmul.f32 %v1354, %v1366
    %v1371 = vmul.f32 %v1355, %v1367
    %v1372 = vmul.f32 %v1356, %v1368
    %v1373 = vmul.f32 %v1357, %v1369
    %1374 = vmatprep.subr.mxu0 0.0
    %1375 = vmatpush1.msra.mxu0 0.0
    %1376 = vmatprep.subr.mxu0 0.0
    %1377 = vmatpush1.msra.mxu0 0.0
    %1378 = vmatprep.subr.mxu0 0.0
    %1379 = vmatpush1.msra.mxu0 0.0
    %1380 = vmatprep.subr.mxu0 0.0
    %1381 = vmatpush1.msra.mxu0 0.0
    %1382 = vmatprep.subr.mxu0 0.0
    %1383 = vmatpush1.msra.mxu0 0.0
    %1384 = vmatprep.subr.mxu0 0.0
    %1385 = vmatpush1.msra.mxu0 0.0
    %1386 = vmatprep.subr.mxu0 0.0
    %1387 = vmatpush1.msra.mxu0 0.0
    %1388 = vmatprep.subr.mxu0 0.0
    %1389 = vmatpush1.msra.mxu0 0.0
    %1390 = vmatprep.subr.mxu0 0.0
    %1391 = vmatpush1.msra.mxu0 0.0
    %1392 = vmatprep.subr.mxu0 0.0
    %1393 = vmatpush1.msra.mxu0 0.0
    %1394 = vmatprep.subr.mxu0 0.0
    %1395 = vmatpush1.msra.mxu0 0.0
    %1396 = vmatprep.subr.mxu0 0.0
    %1397 = vmatpush1.msra.mxu0 0.0
    %1398 = vmatprep.subr.mxu0 0.0
    %1399 = vmatpush1.msra.mxu0 %v1373
    %1400 = vmatprep.subr.mxu0 0.0
    %1401 = vmatpush1.msra.mxu0 %v1372
    %1402 = vmatprep.subr.mxu0 0.0
    %1403 = vmatpush1.msra.mxu0 %v1371
    %1404 = vmatprep.subr.mxu0 0.0
    %1405 = vmatpush1.msra.mxu0 %v1370
    %1406 = vmatprep.subr.mxu0 0.0
    %1407 = vmatpush2.msra.mxu0 0.0
    %1408 = vmatprep.subr.mxu0 0.0
    %1409 = vmatpush2.msra.mxu0 0.0
    %1410 = vmatprep.subr.mxu0 0.0
    %1411 = vmatpush2.msra.mxu0 0.0
    %1412 = vmatprep.subr.mxu0 0.0
    %1413 = vmatpush2.msra.mxu0 0.0
    %1414 = vmatprep.subr.mxu0 0.0
    %1415 = vmatpush2.msra.mxu0 0.0
    %1416 = vmatprep.subr.mxu0 0.0
    %1417 = vmatpush2.msra.mxu0 0.0
    %1418 = vmatprep.subr.mxu0 0.0
    %1419 = vmatpush2.msra.mxu0 0.0
    %1420 = vmatprep.subr.mxu0 0.0
    %1421 = vmatpush2.msra.mxu0 0.0
    %1422 = vmatprep.subr.mxu0 0.0
    %1423 = vmatpush2.msra.mxu0 0.0
    %1424 = vmatprep.subr.mxu0 0.0
    %1425 = vmatpush2.msra.mxu0 0.0
    %1426 = vmatprep.subr.mxu0 0.0
    %1427 = vmatpush2.msra.mxu0 0.0
    %1428 = vmatprep.subr.mxu0 0.0
    %1429 = vmatpush2.msra.mxu0 0.0
    %1430 = vmatprep.subr.mxu0 0.0
    %1431 = vmatpush2.msra.mxu0 0.0
    %1432 = vmatprep.subr.mxu0 0.0
    %1433 = vmatpush2.msra.mxu0 0.0
    %1434 = vmatprep.subr.mxu0 0.0
    %1435 = vmatpush2.msra.mxu0 0.0
    %1436 = vmatprep.subr.mxu0 0.0
    %1437 = vmatpush2.msra.mxu0 0.0
    %1438 = vmatprep.mubr.f32.mxu0 0.0
    %1439 = vmatmul.mubr.f32.gmra.mxu0 %v274
    %v1440 = vpop.f32.mrf.mxu0
    %v1441 = vadd.f32 %v95, %v1440
    %v1442 = vpop.f32.mrf.mxu0
    %1443 = vdwg.mxu0
    %v1444 = vadd.f32 %v1441, %v1253
    %v1445 = vsel %vm123, %v1444, 0.0
    %1446 = vadd.xlane.f32.xlu0 %v1445
    %v1447 = vpop.xlane.xlu0 %1446
    %v1448 = vmul.f32 %v1447, %v127
    %v1449 = vsub.f32 %v1444, %v1448
    %v1450 = vmul.f32 %v1449, %v1449
    %v1451 = vsel %vm123, %v1450, 0.0
    %1452 = vadd.xlane.f32.xlu0 %v1451
    %v1453 = vpop.xlane.xlu0 %1452
    %v1454 = vmul.f32 %v1453, %v127
    %v1455 = vadd.f32 %v1454, 1e-05
    %v1456 = vrsqrt.pop %v1455
    %v1457 = vmul.f32 %v1449, %v1456
    %v1458 = vmul.f32 %v1457, %v51
    %v1459 = vadd.f32 %v1458, %v56
    %v1461 = vsel %vm123, %v1459, 0
    %1463 = vmatprep.subr.mxu0 0.0
    %1464 = vmatpush1.msra.mxu0 0.0
    %1465 = vmatprep.subr.mxu0 0.0
    %1466 = vmatpush1.msra.mxu0 0.0
    %1467 = vmatprep.subr.mxu0 0.0
    %1468 = vmatpush1.msra.mxu0 0.0
    %1469 = vmatprep.subr.mxu0 0.0
    %1470 = vmatpush1.msra.mxu0 0.0
    %1471 = vmatprep.subr.mxu0 0.0
    %1472 = vmatpush1.msra.mxu0 0.0
    %1473 = vmatprep.subr.mxu0 0.0
    %1474 = vmatpush1.msra.mxu0 0.0
    %1475 = vmatprep.subr.mxu0 0.0
    %1476 = vmatpush1.msra.mxu0 0.0
    %1477 = vmatprep.subr.mxu0 0.0
    %1478 = vmatpush1.msra.mxu0 0.0
    %1479 = vmatprep.subr.mxu0 0.0
    %1480 = vmatpush1.msra.mxu0 0.0
    %1481 = vmatprep.subr.mxu0 0.0
    %1482 = vmatpush1.msra.mxu0 0.0
    %1483 = vmatprep.subr.mxu0 0.0
    %1484 = vmatpush1.msra.mxu0 0.0
    %1485 = vmatprep.subr.mxu0 0.0
    %1486 = vmatpush1.msra.mxu0 0.0
    %1487 = vmatprep.subr.mxu0 0.0
    %1488 = vmatpush1.msra.mxu0 %v105
    %1489 = vmatprep.subr.mxu0 0.0
    %1490 = vmatpush1.msra.mxu0 %v104
    %1491 = vmatprep.subr.mxu0 0.0
    %1492 = vmatpush1.msra.mxu0 %v103
    %1493 = vmatprep.subr.mxu0 0.0
    %1494 = vmatpush1.msra.mxu0 %v102
    %1495 = vmatprep.subr.mxu0 0.0
    %1496 = vmatpush2.msra.mxu0 0.0
    %1497 = vmatprep.subr.mxu0 0.0
    %1498 = vmatpush2.msra.mxu0 0.0
    %1499 = vmatprep.subr.mxu0 0.0
    %1500 = vmatpush2.msra.mxu0 0.0
    %1501 = vmatprep.subr.mxu0 0.0
    %1502 = vmatpush2.msra.mxu0 0.0
    %1503 = vmatprep.subr.mxu0 0.0
    %1504 = vmatpush2.msra.mxu0 0.0
    %1505 = vmatprep.subr.mxu0 0.0
    %1506 = vmatpush2.msra.mxu0 0.0
    %1507 = vmatprep.subr.mxu0 0.0
    %1508 = vmatpush2.msra.mxu0 0.0
    %1509 = vmatprep.subr.mxu0 0.0
    %1510 = vmatpush2.msra.mxu0 0.0
    %1511 = vmatprep.subr.mxu0 0.0
    %1512 = vmatpush2.msra.mxu0 0.0
    %1513 = vmatprep.subr.mxu0 0.0
    %1514 = vmatpush2.msra.mxu0 0.0
    %1515 = vmatprep.subr.mxu0 0.0
    %1516 = vmatpush2.msra.mxu0 0.0
    %1517 = vmatprep.subr.mxu0 0.0
    %1518 = vmatpush2.msra.mxu0 0.0
    %1519 = vmatprep.subr.mxu0 0.0
    %1520 = vmatpush2.msra.mxu0 0.0
    %1521 = vmatprep.subr.mxu0 0.0
    %1522 = vmatpush2.msra.mxu0 0.0
    %1523 = vmatprep.subr.mxu0 0.0
    %1524 = vmatpush2.msra.mxu0 0.0
    %1525 = vmatprep.subr.mxu0 0.0
    %1526 = vmatpush2.msra.mxu0 0.0
    %1527 = vmatprep.mubr.f32.mxu0 0.0
    %1528 = vmatmul.mubr.f32.gmra.mxu0 %v1461
    %v1529 = vpop.f32.mrf.mxu0
    %v1530 = vadd.f32 %v66, %v1529
    %v1531 = vpop.f32.mrf.mxu0
    %1532 = vdwg.mxu0
    %v1533 = vmul.f32 %v1530, 0.5
    %v1534 = vmul.f32 %v1530, 0.70710677
    %v1535 = verf.f32.pop %v1534
    %v1536 = vadd.f32 %v1535, 1.0
    %v1537 = vmul.f32 %v1533, %v1536
    %1538 = vmatprep.subr.mxu0 0.0
    %1539 = vmatpush1.msra.mxu0 %v121
    %1540 = vmatprep.subr.mxu0 0.0
    %1541 = vmatpush1.msra.mxu0 %v120
    %1542 = vmatprep.subr.mxu0 0.0
    %1543 = vmatpush1.msra.mxu0 %v119
    %1544 = vmatprep.subr.mxu0 0.0
    %1545 = vmatpush1.msra.mxu0 %v118
    %1546 = vmatprep.subr.mxu0 0.0
    %1547 = vmatpush1.msra.mxu0 %v117
    %1548 = vmatprep.subr.mxu0 0.0
    %1549 = vmatpush1.msra.mxu0 %v116
    %1550 = vmatprep.subr.mxu0 0.0
    %1551 = vmatpush1.msra.mxu0 %v115
    %1552 = vmatprep.subr.mxu0 0.0
    %1553 = vmatpush1.msra.mxu0 %v114
    %1554 = vmatprep.subr.mxu0 0.0
    %1555 = vmatpush1.msra.mxu0 %v113
    %1556 = vmatprep.subr.mxu0 0.0
    %1557 = vmatpush1.msra.mxu0 %v112
    %1558 = vmatprep.subr.mxu0 0.0
    %1559 = vmatpush1.msra.mxu0 %v111
    %1560 = vmatprep.subr.mxu0 0.0
    %1561 = vmatpush1.msra.mxu0 %v110
    %1562 = vmatprep.subr.mxu0 0.0
    %1563 = vmatpush1.msra.mxu0 %v109
    %1564 = vmatprep.subr.mxu0 0.0
    %1565 = vmatpush1.msra.mxu0 %v108
    %1566 = vmatprep.subr.mxu0 0.0
    %1567 = vmatpush1.msra.mxu0 %v107
    %1568 = vmatprep.subr.mxu0 0.0
    %1569 = vmatpush1.msra.mxu0 %v106
    %1570 = vmatprep.subr.mxu0 0.0
    %1571 = vmatpush2.msra.mxu0 0.0
    %1572 = vmatprep.subr.mxu0 0.0
    %1573 = vmatpush2.msra.mxu0 0.0
    %1574 = vmatprep.subr.mxu0 0.0
    %1575 = vmatpush2.msra.mxu0 0.0
    %1576 = vmatprep.subr.mxu0 0.0
    %1577 = vmatpush2.msra.mxu0 0.0
    %1578 = vmatprep.subr.mxu0 0.0
    %1579 = vmatpush2.msra.mxu0 0.0
    %1580 = vmatprep.subr.mxu0 0.0
    %1581 = vmatpush2.msra.mxu0 0.0
    %1582 = vmatprep.subr.mxu0 0.0
    %1583 = vmatpush2.msra.mxu0 0.0
    %1584 = vmatprep.subr.mxu0 0.0
    %1585 = vmatpush2.msra.mxu0 0.0
    %1586 = vmatprep.subr.mxu0 0.0
    %1587 = vmatpush2.msra.mxu0 0.0
    %1588 = vmatprep.subr.mxu0 0.0
    %1589 = vmatpush2.msra.mxu0 0.0
    %1590 = vmatprep.subr.mxu0 0.0
    %1591 = vmatpush2.msra.mxu0 0.0
    %1592 = vmatprep.subr.mxu0 0.0
    %1593 = vmatpush2.msra.mxu0 0.0
    %1594 = vmatprep.subr.mxu0 0.0
    %1595 = vmatpush2.msra.mxu0 0.0
    %1596 = vmatprep.subr.mxu0 0.0
    %1597 = vmatpush2.msra.mxu0 0.0
    %1598 = vmatprep.subr.mxu0 0.0
    %1599 = vmatpush2.msra.mxu0 0.0
    %1600 = vmatprep.subr.mxu0 0.0
    %1601 = vmatpush2.msra.mxu0 0.0
    %1602 = vmatprep.mubr.f32.mxu0 0.0
    %1603 = vmatmul.mubr.f32.gmra.mxu0 %v1537
    %v1604 = vpop.f32.mrf.mxu0
    %v1605 = vadd.f32 %v61, %v1604
    %v1606 = vpop.f32.mrf.mxu0
    %1607 = vdwg.mxu0
    %v1608 = vadd.f32 %v1605, %v1444
    %v1609 = vsel %vm123, %v1608, 0.0
    %1610 = vadd.xlane.f32.xlu0 %v1609
    %v1611 = vpop.xlane.xlu0 %1610
    %v1612 = vmul.f32 %v1611, %v127
    %v1613 = vsub.f32 %v1608, %v1612
    %v1614 = vmul.f32 %v1613, %v1613
    %v1615 = vsel %vm123, %v1614, 0.0
    %1616 = vadd.xlane.f32.xlu0 %v1615
    %v1617 = vpop.xlane.xlu0 %1616
    %v1618 = vmul.f32 %v1617, %v127
    %v1619 = vadd.f32 %v1618, 1e-05
    %v1620 = vrsqrt.pop %v1619
    %v1621 = vmul.f32 %v1613, %v1620
    %v1622 = vmul.f32 %v1621, %v31
    %v1623 = vadd.f32 %v1622, %v36
    %s1624 = scalar_lea.vmem [#allocation2], 8
    %1625 = vst.msk [vmem:[%s1624] sm:$0xff] %vm123, %v1623
    // Predicated region
    $region30: #{tpu_custom_call.1} parent=1 // pred_check
      _
    $region31: #{tpu_custom_call.1} parent=1 // pred_check_branch
      %1627 = sbr.rel (0) target = $region33
    $region32: #{tpu_custom_call.1} parent=1 // pred_region
      %s1629 = ssub.s32 256, 256
      %1630 = vsyncadd [#allocation3], %s1629
      %s1631 = sshll.u32 [#allocation2], 4
      %s1632 = int_to_ptr.vmem [resolvable:$true] %s1631
      %1637 = dma.vmem_to_hbm [thread:$0]  %s1632, 256, %s7, [#allocation3], 128, 128, 8
    $region33: #{tpu_custom_call.1} parent=1 // pred_fallthru
      _
    // Predicated region
    $region34: #{tpu_custom_call.1} parent=1 // pred_check
      _
    $region35: #{tpu_custom_call.1} parent=1 // pred_check_branch
      %1639 = sbr.rel (0) target = $region37
    $region36: #{tpu_custom_call.1} parent=1 // pred_region
      %1640 = dma.done [#allocation3], 256
    $region37: #{tpu_custom_call.1} parent=1 // pred_fallthru
      _
    %1641 = vsyncpa [#allocation3], 1

</llo_original>
